<compile_context>
chip_gen: v5e
topology: v5e:2x2
jax: 0.10.0
libtpu: 0.0.40
codegen_flags: <defaults>
</compile_context>

<pallas_src>
import functools

import jax
import jax.numpy as jnp
from jax.experimental import pallas as pl
from jax.experimental.pallas import tpu as pltpu


def _fire_kernel(num_layers, seq_len, hidden_dim, event_vec_dim, batch, pair,
                 *refs):
    """Single-invocation kernel; everything lives in VMEM.

    pair=True  (L==2, 256-wide MXU):
        refs = (x_tb, wih0T, bias0, wpair, bias1, woutT, bout, out)
    pair=False (generic):
        refs = (x_tb, wih0T, bias0, whh0T, [wcat_l, bias_l]*(L-1), woutT, bout, out)

    x_tb is time-major flattened: shape (T*Bp, E), rows [t*Bp:(t+1)*Bp] = step t.
    All 4H gate blocks have their g columns (2H:3H) pre-scaled by 2.
    """
    L, T, H, B, E = num_layers, seq_len, hidden_dim, batch, event_vec_dim

    x_ref, wih0T_ref, bias0_ref = refs[0], refs[1], refs[2]
    if pair:
        wpair_ref, bias1_ref, woutT_ref, bout_ref, out_ref = refs[3:8]
    else:
        whh0T_ref = refs[3]
        idx = 4
        wcat_refs, biasc_refs = [], []
        for _ in range(L - 1):
            wcat_refs.append(refs[idx])
            biasc_refs.append(refs[idx + 1])
            idx += 2
        woutT_ref, bout_ref, out_ref = refs[idx], refs[idx + 1], refs[idx + 2]

    # ---- Hoisted layer-0 input projection: one (T*Bp, E) x (E, 4H) matmul,
    #      bias folded in.  Each timestep slice is an aligned (8, 128) vreg. ----
    gx0 = (jnp.dot(x_ref[...], wih0T_ref[...],
                   preferred_element_type=jnp.float32)
           + bias0_ref[...])                                     # (T*Bp, 4H)
    gx0_t = [gx0[t * B:(t + 1) * B, :] for t in range(T)]        # each (Bp, 4H)

    # Hoisted output-linear operands; accumulator starts at the output bias.
    wout = woutT_ref[...]                                        # (T*H, E)
    out_acc = jnp.broadcast_to(bout_ref[...], (B, E))            # (Bp, E)

    def cell_update(gates, c_prev):
        # One EUP push: sigmoid over the full (Bp, 4H) gates vreg.
        # Gate order i, f, g, o; g columns were pre-scaled by 2, so
        # tanh(g) = 2*sigmoid(2g) - 1 is recovered with cheap VPU ops.
        sg = jax.nn.sigmoid(gates)
        i_g = sg[:, 0 * H:1 * H]
        f_g = sg[:, 1 * H:2 * H]
        g_g = 2.0 * sg[:, 2 * H:3 * H] - 1.0
        o_g = sg[:, 3 * H:4 * H]
        c_new = f_g * c_prev + i_g * g_g
        h_new = o_g * jnp.tanh(c_new)
        return h_new, c_new

    if pair:
        # ---- L == 2, one 256-lane MXU push per wavefront step. ----
        wpair = wpair_ref[...]                                   # (3H, 8H)
        bias1_b = jnp.broadcast_to(bias1_ref[...], (B, 4 * H))
        h0 = jnp.zeros((B, H), jnp.float32)
        c0 = jnp.zeros((B, H), jnp.float32)
        h1 = jnp.zeros((B, H), jnp.float32)
        c1 = jnp.zeros((B, H), jnp.float32)

        # Step 0: only layer 0 active and h0 == 0, so gates are just gx0_t[0].
        h0, c0 = cell_update(gx0_t[0], c0)

        for s in range(1, T + 1):
            # Both layers read the PREVIOUS step's states; one fused matmul
            # yields [h0@whh0 | h0@wih1 + h1@whh1] as a (Bp, 8H) result.
            lhs = jnp.concatenate([h0, h0, h1], axis=1)          # (Bp, 3H)
            res = jnp.dot(lhs, wpair, preferred_element_type=jnp.float32)
            if s < T:
                gates0 = res[:, :4 * H] + gx0_t[s]
                h0n, c0n = cell_update(gates0, c0)
            gates1 = res[:, 4 * H:] + bias1_b
            h1, c1 = cell_update(gates1, c1)
            # Fold the output Linear in: partial dot for timestep t = s - 1.
            out_acc = out_acc + jnp.dot(
                h1, wout[(s - 1) * H:s * H, :],
                preferred_element_type=jnp.float32)
            if s < T:
                h0, c0 = h0n, c0n
    else:
        # ---- Generic wavefront: one K-concat fused matmul per layer per step. ----
        whh0 = whh0T_ref[...]                                    # (H, 4H)
        wcat = [wcat_refs[i][...] for i in range(L - 1)]         # (2H, 4H)
        bias_b = [jnp.broadcast_to(biasc_refs[i][...], (B, 4 * H))
                  for i in range(L - 1)]

        h = [jnp.zeros((B, H), jnp.float32) for _ in range(L)]
        c = [jnp.zeros((B, H), jnp.float32) for _ in range(L)]

        for s in range(T + L - 1):
            new_h, new_c = list(h), list(c)
            for l in range(L):
                t = s - l
                if not (0 <= t < T):
                    continue
                if l == 0:
                    if t == 0:
                        gates = gx0_t[0]                         # h0 == 0
                    else:
                        gates = gx0_t[t] + jnp.dot(
                            h[0], whh0, preferred_element_type=jnp.float32)
                else:
                    # Input to layer l at time t is h_{l-1}(t) == old h[l-1].
                    lhs = jnp.concatenate([h[l - 1], h[l]], axis=1)  # (Bp, 2H)
                    gates = (jnp.dot(lhs, wcat[l - 1],
                                     preferred_element_type=jnp.float32)
                             + bias_b[l - 1])
                h_new, c_new = cell_update(gates, c[l])
                new_h[l], new_c[l] = h_new, c_new
                if l == L - 1:
                    out_acc = out_acc + jnp.dot(
                        h_new, wout[t * H:(t + 1) * H, :],
                        preferred_element_type=jnp.float32)
            h, c = new_h, new_c

    out_ref[...] = out_acc                                       # (Bp, E)


def should_pair_layers(num_layers):
    """256-lane layer pairing only pays off on 256-wide MXUs (v6e / v7x)."""
    if num_layers != 2:
        return False
    try:
        kind = jax.devices()[0].device_kind.lower()
    except Exception:
        return False
    return ("v6" in kind) or ("v7" in kind)


def prepare_fire_params(lstm_params, out_w, out_b, *, hidden_dim, pair_layers):
    """One-time parameter prep: transpose, bias-sum, g-gate pre-scale, stacking."""
    H = hidden_dim

    def scale_g(m):
        # Scale the g-gate block (cols 2H:3H) by 2 so tanh(g) = 2*sigmoid(2g)-1.
        m = jnp.asarray(m, jnp.float32)
        return jnp.concatenate(
            [m[..., :2 * H], 2.0 * m[..., 2 * H:3 * H], m[..., 3 * H:]],
            axis=-1)

    wihT, whhT, bias = [], [], []
    for (w_ih, w_hh, b_ih, b_hh) in lstm_params:
        wihT.append(scale_g(jnp.asarray(w_ih, jnp.float32).T))      # (in, 4H)
        whhT.append(scale_g(jnp.asarray(w_hh, jnp.float32).T))      # (H, 4H)
        bias.append(scale_g((jnp.asarray(b_ih, jnp.float32)
                             + jnp.asarray(b_hh, jnp.float32))[None, :]))

    woutT = jnp.asarray(out_w, jnp.float32).T                       # (T*H, E)
    bout = jnp.asarray(out_b, jnp.float32)[None, :]                 # (1, E)

    if pair_layers:
        assert len(lstm_params) == 2
        z = jnp.zeros((H, 4 * H), jnp.float32)
        wpair = jnp.concatenate([
            jnp.concatenate([whhT[0], z], axis=1),                  # rows 0:H
            jnp.concatenate([z, wihT[1]], axis=1),                  # rows H:2H
            jnp.concatenate([z, whhT[1]], axis=1),                  # rows 2H:3H
        ], axis=0)                                                  # (3H, 8H)
        return [wihT[0], bias[0], wpair, bias[1], woutT, bout]

    params = [wihT[0], bias[0], whhT[0]]
    for l in range(1, len(lstm_params)):
        params.append(jnp.concatenate([wihT[l], whhT[l]], axis=0))  # (2H, 4H)
        params.append(bias[l])
    params += [woutT, bout]
    return params


@functools.partial(jax.jit,
                   static_argnames=("seq_len", "hidden_dim", "event_vec_dim",
                                    "num_layers", "pair_layers"))
def fire_predictor_forward(x, prepped_params, *, seq_len, hidden_dim,
                           event_vec_dim, num_layers, pair_layers):
    """x: (B, seq_len, event_vec_dim) -> (B, event_vec_dim), float32."""
    B = x.shape[0]
    T, E, H = seq_len, event_vec_dim, hidden_dim
    Bp = ((B + 7) // 8) * 8          # pad batch to the f32 sublane tile

    xf = x.astype(jnp.float32)
    if Bp != B:
        xf = jnp.concatenate(
            [xf, jnp.zeros((Bp - B, T, E), jnp.float32)], axis=0)
    # Time-major, row-flattened so the hoisted projection is one 2-D matmul and
    # per-step slices are aligned (8, 128) vregs.
    x_tb = jnp.transpose(xf, (1, 0, 2)).reshape(T * Bp, E)

    kernel = functools.partial(_fire_kernel, num_layers, T, H, E, Bp,
                               pair_layers)
    vmem = pl.BlockSpec(memory_space=pltpu.MemorySpace.VMEM)
    flat_inputs = [x_tb] + list(prepped_params)

    out = pl.pallas_call(
        kernel,
        out_shape=jax.ShapeDtypeStruct((Bp, E), jnp.float32),
        in_specs=[vmem] * len(flat_inputs),
        out_specs=vmem,
    )(*flat_inputs)
    return out[:B]


def _reference_forward(x, lstm_params, out_w, out_b, *, hidden_dim):
    """Pure-JAX reference of the same forward pass (sanity check)."""
    B, T, _ = x.shape
    H = hidden_dim
    inp = x
    for (w_ih, w_hh, b_ih, b_hh) in lstm_params:
        h = jnp.zeros((B, H), jnp.float32)
        c = jnp.zeros((B, H), jnp.float32)
        outs = []
        for t in range(T):
            gates = inp[:, t, :] @ w_ih.T + b_ih + h @ w_hh.T + b_hh
            i_g = jax.nn.sigmoid(gates[:, 0 * H:1 * H])
            f_g = jax.nn.sigmoid(gates[:, 1 * H:2 * H])
            g_g = jnp.tanh(gates[:, 2 * H:3 * H])
            o_g = jax.nn.sigmoid(gates[:, 3 * H:4 * H])
            c = f_g * c + i_g * g_g
            h = o_g * jnp.tanh(c)
            outs.append(h)
        inp = jnp.stack(outs, axis=1)
    flat = inp.reshape(B, -1)
    return flat @ out_w.T + out_b


if __name__ == "__main__":
    # Small shapes consistent with the module's forward.
    batch = 2
    event_vec_dim = 4
    seq_len = 8
    hidden_dim = 32
    num_layers = 2

    key = jax.random.PRNGKey(0)

    # Deterministic parameter init (PyTorch-style uniform(-k, k)).
    k_lstm = 1.0 / jnp.sqrt(hidden_dim)
    lstm_params = []
    for l in range(num_layers):
        in_dim = event_vec_dim if l == 0 else hidden_dim
        key, k1, k2, k3, k4 = jax.random.split(key, 5)
        w_ih = jax.random.uniform(k1, (4 * hidden_dim, in_dim),
                                  jnp.float32, -k_lstm, k_lstm)
        w_hh = jax.random.uniform(k2, (4 * hidden_dim, hidden_dim),
                                  jnp.float32, -k_lstm, k_lstm)
        b_ih = jax.random.uniform(k3, (4 * hidden_dim,),
                                  jnp.float32, -k_lstm, k_lstm)
        b_hh = jax.random.uniform(k4, (4 * hidden_dim,),
                                  jnp.float32, -k_lstm, k_lstm)
        lstm_params.append((w_ih, w_hh, b_ih, b_hh))

    k_out = 1.0 / jnp.sqrt(hidden_dim * seq_len)
    key, k5, k6, k7 = jax.random.split(key, 4)
    out_w = jax.random.uniform(k5, (event_vec_dim, hidden_dim * seq_len),
                               jnp.float32, -k_out, k_out)
    out_b = jax.random.uniform(k6, (event_vec_dim,),
                               jnp.float32, -k_out, k_out)

    x = jax.random.normal(k7, (batch, seq_len, event_vec_dim), jnp.float32)

    pair = should_pair_layers(num_layers)
    prepped = prepare_fire_params(lstm_params, out_w, out_b,
                                  hidden_dim=hidden_dim, pair_layers=pair)

    y = fire_predictor_forward(x, prepped,
                               seq_len=seq_len, hidden_dim=hidden_dim,
                               event_vec_dim=event_vec_dim,
                               num_layers=num_layers, pair_layers=pair)
    y = jax.block_until_ready(y)

    y_ref = _reference_forward(x, lstm_params, out_w, out_b,
                               hidden_dim=hidden_dim)
    assert y.shape == (batch, event_vec_dim)
    assert jnp.allclose(y, y_ref, atol=1e-4, rtol=1e-4), "mismatch vs reference"

    print("KERNEL_OK")
</pallas_src>

<mosaic_0001>
module attributes {stable_mosaic.version = 11 : i64} {
  func.func @_fire_kernel(%arg0: memref<64x4xf32, #tpu.memory_space<vmem>>, %arg1: memref<4x128xf32, #tpu.memory_space<vmem>>, %arg2: memref<1x128xf32, #tpu.memory_space<vmem>>, %arg3: memref<32x128xf32, #tpu.memory_space<vmem>>, %arg4: memref<64x128xf32, #tpu.memory_space<vmem>>, %arg5: memref<1x128xf32, #tpu.memory_space<vmem>>, %arg6: memref<256x4xf32, #tpu.memory_space<vmem>>, %arg7: memref<1x4xf32, #tpu.memory_space<vmem>>, %arg8: memref<8x4xf32, #tpu.memory_space<vmem>>) attributes {dimension_semantics = [], scalar_prefetch = 0 : i64, scratch_operands = 0 : i64, tpu.core_type = #tpu.core_type<tc>} {
    %c0 = arith.constant 0 : index
    %c0_0 = arith.constant 0 : index
    %0 = vector.load %arg0[%c0, %c0_0] : memref<64x4xf32, #tpu.memory_space<vmem>>, vector<64x4xf32>
    %c0_1 = arith.constant 0 : index
    %c0_2 = arith.constant 0 : index
    %1 = vector.load %arg1[%c0_1, %c0_2] : memref<4x128xf32, #tpu.memory_space<vmem>>, vector<4x128xf32>
    %cst = arith.constant dense<0.000000e+00> : vector<64x128xf32>
    %2 = tpu.matmul %0, %1, %cst {dimension_numbers = #tpu.dot_dimension_numbers<[1], [0], [0], [1], [0, 0, 1, 1], [], []>} : vector<64x4xf32>, vector<4x128xf32>, vector<64x128xf32> -> vector<64x128xf32>
    %c0_3 = arith.constant 0 : index
    %c0_4 = arith.constant 0 : index
    %3 = vector.load %arg2[%c0_3, %c0_4] : memref<1x128xf32, #tpu.memory_space<vmem>>, vector<1x128xf32>
    %4 = vector.broadcast %3 : vector<1x128xf32> to vector<64x128xf32>
    %5 = arith.addf %2, %4 : vector<64x128xf32>
    %6 = vector.extract_strided_slice %5 {offsets = [0, 0], sizes = [8, 128], strides = [1, 1]} : vector<64x128xf32> to vector<8x128xf32>
    %7 = vector.extract_strided_slice %5 {offsets = [8, 0], sizes = [8, 128], strides = [1, 1]} : vector<64x128xf32> to vector<8x128xf32>
    %8 = vector.extract_strided_slice %5 {offsets = [16, 0], sizes = [8, 128], strides = [1, 1]} : vector<64x128xf32> to vector<8x128xf32>
    %9 = vector.extract_strided_slice %5 {offsets = [24, 0], sizes = [8, 128], strides = [1, 1]} : vector<64x128xf32> to vector<8x128xf32>
    %10 = vector.extract_strided_slice %5 {offsets = [32, 0], sizes = [8, 128], strides = [1, 1]} : vector<64x128xf32> to vector<8x128xf32>
    %11 = vector.extract_strided_slice %5 {offsets = [40, 0], sizes = [8, 128], strides = [1, 1]} : vector<64x128xf32> to vector<8x128xf32>
    %12 = vector.extract_strided_slice %5 {offsets = [48, 0], sizes = [8, 128], strides = [1, 1]} : vector<64x128xf32> to vector<8x128xf32>
    %13 = vector.extract_strided_slice %5 {offsets = [56, 0], sizes = [8, 128], strides = [1, 1]} : vector<64x128xf32> to vector<8x128xf32>
    %c0_5 = arith.constant 0 : index
    %c0_6 = arith.constant 0 : index
    %14 = vector.load %arg6[%c0_5, %c0_6] : memref<256x4xf32, #tpu.memory_space<vmem>>, vector<256x4xf32>
    %c0_7 = arith.constant 0 : index
    %c0_8 = arith.constant 0 : index
    %15 = vector.load %arg7[%c0_7, %c0_8] : memref<1x4xf32, #tpu.memory_space<vmem>>, vector<1x4xf32>
    %16 = vector.shape_cast %15 : vector<1x4xf32> to vector<1x4xf32>
    %17 = vector.broadcast %16 : vector<1x4xf32> to vector<8x4xf32>
    %c0_9 = arith.constant 0 : index
    %c0_10 = arith.constant 0 : index
    %18 = vector.load %arg3[%c0_9, %c0_10] : memref<32x128xf32, #tpu.memory_space<vmem>>, vector<32x128xf32>
    %c0_11 = arith.constant 0 : index
    %c0_12 = arith.constant 0 : index
    %19 = vector.load %arg4[%c0_11, %c0_12] : memref<64x128xf32, #tpu.memory_space<vmem>>, vector<64x128xf32>
    %c0_13 = arith.constant 0 : index
    %c0_14 = arith.constant 0 : index
    %20 = vector.load %arg5[%c0_13, %c0_14] : memref<1x128xf32, #tpu.memory_space<vmem>>, vector<1x128xf32>
    %21 = vector.shape_cast %20 : vector<1x128xf32> to vector<1x128xf32>
    %22 = vector.broadcast %21 : vector<1x128xf32> to vector<8x128xf32>
    %cst_15 = arith.constant 0.000000e+00 : f32
    %23 = vector.broadcast %cst_15 : f32 to vector<8x32xf32>
    %cst_16 = arith.constant 0.000000e+00 : f32
    %24 = vector.broadcast %cst_16 : f32 to vector<8x32xf32>
    %cst_17 = arith.constant 0.000000e+00 : f32
    %25 = vector.broadcast %cst_17 : f32 to vector<8x32xf32>
    %26 = arith.negf %6 : vector<8x128xf32>
    %27 = math.exp %26 : vector<8x128xf32>
    %cst_18 = arith.constant 1.000000e+00 : f32
    %28 = vector.broadcast %cst_18 : f32 to vector<8x128xf32>
    %29 = arith.addf %28, %27 : vector<8x128xf32>
    %30 = arith.divf %28, %29 : vector<8x128xf32>
    %31 = vector.extract_strided_slice %30 {offsets = [0, 0], sizes = [8, 32], strides = [1, 1]} : vector<8x128xf32> to vector<8x32xf32>
    %32 = vector.extract_strided_slice %30 {offsets = [0, 32], sizes = [8, 32], strides = [1, 1]} : vector<8x128xf32> to vector<8x32xf32>
    %33 = vector.extract_strided_slice %30 {offsets = [0, 64], sizes = [8, 32], strides = [1, 1]} : vector<8x128xf32> to vector<8x32xf32>
    %cst_19 = arith.constant 2.000000e+00 : f32
    %34 = vector.broadcast %cst_19 : f32 to vector<8x32xf32>
    %35 = arith.mulf %34, %33 : vector<8x32xf32>
    %cst_20 = arith.constant 1.000000e+00 : f32
    %36 = vector.broadcast %cst_20 : f32 to vector<8x32xf32>
    %37 = arith.subf %35, %36 : vector<8x32xf32>
    %38 = vector.extract_strided_slice %30 {offsets = [0, 96], sizes = [8, 32], strides = [1, 1]} : vector<8x128xf32> to vector<8x32xf32>
    %39 = arith.mulf %32, %24 : vector<8x32xf32>
    %40 = arith.mulf %31, %37 : vector<8x32xf32>
    %41 = arith.addf %39, %40 : vector<8x32xf32>
    %42 = math.tanh %41 : vector<8x32xf32>
    %43 = arith.mulf %38, %42 : vector<8x32xf32>
    %cst_21 = arith.constant dense<0.000000e+00> : vector<8x128xf32>
    %44 = tpu.matmul %43, %18, %cst_21 {dimension_numbers = #tpu.dot_dimension_numbers<[1], [0], [0], [1], [0, 0, 1, 1], [], []>} : vector<8x32xf32>, vector<32x128xf32>, vector<8x128xf32> -> vector<8x128xf32>
    %45 = arith.addf %7, %44 : vector<8x128xf32>
    %46 = arith.negf %45 : vector<8x128xf32>
    %47 = math.exp %46 : vector<8x128xf32>
    %cst_22 = arith.constant 1.000000e+00 : f32
    %48 = vector.broadcast %cst_22 : f32 to vector<8x128xf32>
    %49 = arith.addf %48, %47 : vector<8x128xf32>
    %50 = arith.divf %48, %49 : vector<8x128xf32>
    %51 = vector.extract_strided_slice %50 {offsets = [0, 0], sizes = [8, 32], strides = [1, 1]} : vector<8x128xf32> to vector<8x32xf32>
    %52 = vector.extract_strided_slice %50 {offsets = [0, 32], sizes = [8, 32], strides = [1, 1]} : vector<8x128xf32> to vector<8x32xf32>
    %53 = vector.extract_strided_slice %50 {offsets = [0, 64], sizes = [8, 32], strides = [1, 1]} : vector<8x128xf32> to vector<8x32xf32>
    %cst_23 = arith.constant 2.000000e+00 : f32
    %54 = vector.broadcast %cst_23 : f32 to vector<8x32xf32>
    %55 = arith.mulf %54, %53 : vector<8x32xf32>
    %cst_24 = arith.constant 1.000000e+00 : f32
    %56 = vector.broadcast %cst_24 : f32 to vector<8x32xf32>
    %57 = arith.subf %55, %56 : vector<8x32xf32>
    %58 = vector.extract_strided_slice %50 {offsets = [0, 96], sizes = [8, 32], strides = [1, 1]} : vector<8x128xf32> to vector<8x32xf32>
    %59 = arith.mulf %52, %41 : vector<8x32xf32>
    %60 = arith.mulf %51, %57 : vector<8x32xf32>
    %61 = arith.addf %59, %60 : vector<8x32xf32>
    %62 = math.tanh %61 : vector<8x32xf32>
    %63 = arith.mulf %58, %62 : vector<8x32xf32>
    %64 = tpu.concatenate %43, %23 in 1 : vector<8x32xf32>, vector<8x32xf32> -> vector<8x64xf32>
    %cst_25 = arith.constant dense<0.000000e+00> : vector<8x128xf32>
    %65 = tpu.matmul %64, %19, %cst_25 {dimension_numbers = #tpu.dot_dimension_numbers<[1], [0], [0], [1], [0, 0, 1, 1], [], []>} : vector<8x64xf32>, vector<64x128xf32>, vector<8x128xf32> -> vector<8x128xf32>
    %66 = arith.addf %65, %22 : vector<8x128xf32>
    %67 = arith.negf %66 : vector<8x128xf32>
    %68 = math.exp %67 : vector<8x128xf32>
    %cst_26 = arith.constant 1.000000e+00 : f32
    %69 = vector.broadcast %cst_26 : f32 to vector<8x128xf32>
    %70 = arith.addf %69, %68 : vector<8x128xf32>
    %71 = arith.divf %69, %70 : vector<8x128xf32>
    %72 = vector.extract_strided_slice %71 {offsets = [0, 0], sizes = [8, 32], strides = [1, 1]} : vector<8x128xf32> to vector<8x32xf32>
    %73 = vector.extract_strided_slice %71 {offsets = [0, 32], sizes = [8, 32], strides = [1, 1]} : vector<8x128xf32> to vector<8x32xf32>
    %74 = vector.extract_strided_slice %71 {offsets = [0, 64], sizes = [8, 32], strides = [1, 1]} : vector<8x128xf32> to vector<8x32xf32>
    %cst_27 = arith.constant 2.000000e+00 : f32
    %75 = vector.broadcast %cst_27 : f32 to vector<8x32xf32>
    %76 = arith.mulf %75, %74 : vector<8x32xf32>
    %cst_28 = arith.constant 1.000000e+00 : f32
    %77 = vector.broadcast %cst_28 : f32 to vector<8x32xf32>
    %78 = arith.subf %76, %77 : vector<8x32xf32>
    %79 = vector.extract_strided_slice %71 {offsets = [0, 96], sizes = [8, 32], strides = [1, 1]} : vector<8x128xf32> to vector<8x32xf32>
    %80 = arith.mulf %73, %25 : vector<8x32xf32>
    %81 = arith.mulf %72, %78 : vector<8x32xf32>
    %82 = arith.addf %80, %81 : vector<8x32xf32>
    %83 = math.tanh %82 : vector<8x32xf32>
    %84 = arith.mulf %79, %83 : vector<8x32xf32>
    %85 = vector.extract_strided_slice %14 {offsets = [0, 0], sizes = [32, 4], strides = [1, 1]} : vector<256x4xf32> to vector<32x4xf32>
    %cst_29 = arith.constant dense<0.000000e+00> : vector<8x4xf32>
    %86 = tpu.matmul %84, %85, %cst_29 {dimension_numbers = #tpu.dot_dimension_numbers<[1], [0], [0], [1], [0, 0, 1, 1], [], []>} : vector<8x32xf32>, vector<32x4xf32>, vector<8x4xf32> -> vector<8x4xf32>
    %87 = arith.addf %17, %86 : vector<8x4xf32>
    %cst_30 = arith.constant dense<0.000000e+00> : vector<8x128xf32>
    %88 = tpu.matmul %63, %18, %cst_30 {dimension_numbers = #tpu.dot_dimension_numbers<[1], [0], [0], [1], [0, 0, 1, 1], [], []>} : vector<8x32xf32>, vector<32x128xf32>, vector<8x128xf32> -> vector<8x128xf32>
    %89 = arith.addf %8, %88 : vector<8x128xf32>
    %90 = arith.negf %89 : vector<8x128xf32>
    %91 = math.exp %90 : vector<8x128xf32>
    %cst_31 = arith.constant 1.000000e+00 : f32
    %92 = vector.broadcast %cst_31 : f32 to vector<8x128xf32>
    %93 = arith.addf %92, %91 : vector<8x128xf32>
    %94 = arith.divf %92, %93 : vector<8x128xf32>
    %95 = vector.extract_strided_slice %94 {offsets = [0, 0], sizes = [8, 32], strides = [1, 1]} : vector<8x128xf32> to vector<8x32xf32>
    %96 = vector.extract_strided_slice %94 {offsets = [0, 32], sizes = [8, 32], strides = [1, 1]} : vector<8x128xf32> to vector<8x32xf32>
    %97 = vector.extract_strided_slice %94 {offsets = [0, 64], sizes = [8, 32], strides = [1, 1]} : vector<8x128xf32> to vector<8x32xf32>
    %cst_32 = arith.constant 2.000000e+00 : f32
    %98 = vector.broadcast %cst_32 : f32 to vector<8x32xf32>
    %99 = arith.mulf %98, %97 : vector<8x32xf32>
    %cst_33 = arith.constant 1.000000e+00 : f32
    %100 = vector.broadcast %cst_33 : f32 to vector<8x32xf32>
    %101 = arith.subf %99, %100 : vector<8x32xf32>
    %102 = vector.extract_strided_slice %94 {offsets = [0, 96], sizes = [8, 32], strides = [1, 1]} : vector<8x128xf32> to vector<8x32xf32>
    %103 = arith.mulf %96, %61 : vector<8x32xf32>
    %104 = arith.mulf %95, %101 : vector<8x32xf32>
    %105 = arith.addf %103, %104 : vector<8x32xf32>
    %106 = math.tanh %105 : vector<8x32xf32>
    %107 = arith.mulf %102, %106 : vector<8x32xf32>
    %108 = tpu.concatenate %63, %84 in 1 : vector<8x32xf32>, vector<8x32xf32> -> vector<8x64xf32>
    %cst_34 = arith.constant dense<0.000000e+00> : vector<8x128xf32>
    %109 = tpu.matmul %108, %19, %cst_34 {dimension_numbers = #tpu.dot_dimension_numbers<[1], [0], [0], [1], [0, 0, 1, 1], [], []>} : vector<8x64xf32>, vector<64x128xf32>, vector<8x128xf32> -> vector<8x128xf32>
    %110 = arith.addf %109, %22 : vector<8x128xf32>
    %111 = arith.negf %110 : vector<8x128xf32>
    %112 = math.exp %111 : vector<8x128xf32>
    %cst_35 = arith.constant 1.000000e+00 : f32
    %113 = vector.broadcast %cst_35 : f32 to vector<8x128xf32>
    %114 = arith.addf %113, %112 : vector<8x128xf32>
    %115 = arith.divf %113, %114 : vector<8x128xf32>
    %116 = vector.extract_strided_slice %115 {offsets = [0, 0], sizes = [8, 32], strides = [1, 1]} : vector<8x128xf32> to vector<8x32xf32>
    %117 = vector.extract_strided_slice %115 {offsets = [0, 32], sizes = [8, 32], strides = [1, 1]} : vector<8x128xf32> to vector<8x32xf32>
    %118 = vector.extract_strided_slice %115 {offsets = [0, 64], sizes = [8, 32], strides = [1, 1]} : vector<8x128xf32> to vector<8x32xf32>
    %cst_36 = arith.constant 2.000000e+00 : f32
    %119 = vector.broadcast %cst_36 : f32 to vector<8x32xf32>
    %120 = arith.mulf %119, %118 : vector<8x32xf32>
    %cst_37 = arith.constant 1.000000e+00 : f32
    %121 = vector.broadcast %cst_37 : f32 to vector<8x32xf32>
    %122 = arith.subf %120, %121 : vector<8x32xf32>
    %123 = vector.extract_strided_slice %115 {offsets = [0, 96], sizes = [8, 32], strides = [1, 1]} : vector<8x128xf32> to vector<8x32xf32>
    %124 = arith.mulf %117, %82 : vector<8x32xf32>
    %125 = arith.mulf %116, %122 : vector<8x32xf32>
    %126 = arith.addf %124, %125 : vector<8x32xf32>
    %127 = math.tanh %126 : vector<8x32xf32>
    %128 = arith.mulf %123, %127 : vector<8x32xf32>
    %129 = vector.extract_strided_slice %14 {offsets = [32, 0], sizes = [32, 4], strides = [1, 1]} : vector<256x4xf32> to vector<32x4xf32>
    %cst_38 = arith.constant dense<0.000000e+00> : vector<8x4xf32>
    %130 = tpu.matmul %128, %129, %cst_38 {dimension_numbers = #tpu.dot_dimension_numbers<[1], [0], [0], [1], [0, 0, 1, 1], [], []>} : vector<8x32xf32>, vector<32x4xf32>, vector<8x4xf32> -> vector<8x4xf32>
    %131 = arith.addf %87, %130 : vector<8x4xf32>
    %cst_39 = arith.constant dense<0.000000e+00> : vector<8x128xf32>
    %132 = tpu.matmul %107, %18, %cst_39 {dimension_numbers = #tpu.dot_dimension_numbers<[1], [0], [0], [1], [0, 0, 1, 1], [], []>} : vector<8x32xf32>, vector<32x128xf32>, vector<8x128xf32> -> vector<8x128xf32>
    %133 = arith.addf %9, %132 : vector<8x128xf32>
    %134 = arith.negf %133 : vector<8x128xf32>
    %135 = math.exp %134 : vector<8x128xf32>
    %cst_40 = arith.constant 1.000000e+00 : f32
    %136 = vector.broadcast %cst_40 : f32 to vector<8x128xf32>
    %137 = arith.addf %136, %135 : vector<8x128xf32>
    %138 = arith.divf %136, %137 : vector<8x128xf32>
    %139 = vector.extract_strided_slice %138 {offsets = [0, 0], sizes = [8, 32], strides = [1, 1]} : vector<8x128xf32> to vector<8x32xf32>
    %140 = vector.extract_strided_slice %138 {offsets = [0, 32], sizes = [8, 32], strides = [1, 1]} : vector<8x128xf32> to vector<8x32xf32>
    %141 = vector.extract_strided_slice %138 {offsets = [0, 64], sizes = [8, 32], strides = [1, 1]} : vector<8x128xf32> to vector<8x32xf32>
    %cst_41 = arith.constant 2.000000e+00 : f32
    %142 = vector.broadcast %cst_41 : f32 to vector<8x32xf32>
    %143 = arith.mulf %142, %141 : vector<8x32xf32>
    %cst_42 = arith.constant 1.000000e+00 : f32
    %144 = vector.broadcast %cst_42 : f32 to vector<8x32xf32>
    %145 = arith.subf %143, %144 : vector<8x32xf32>
    %146 = vector.extract_strided_slice %138 {offsets = [0, 96], sizes = [8, 32], strides = [1, 1]} : vector<8x128xf32> to vector<8x32xf32>
    %147 = arith.mulf %140, %105 : vector<8x32xf32>
    %148 = arith.mulf %139, %145 : vector<8x32xf32>
    %149 = arith.addf %147, %148 : vector<8x32xf32>
    %150 = math.tanh %149 : vector<8x32xf32>
    %151 = arith.mulf %146, %150 : vector<8x32xf32>
    %152 = tpu.concatenate %107, %128 in 1 : vector<8x32xf32>, vector<8x32xf32> -> vector<8x64xf32>
    %cst_43 = arith.constant dense<0.000000e+00> : vector<8x128xf32>
    %153 = tpu.matmul %152, %19, %cst_43 {dimension_numbers = #tpu.dot_dimension_numbers<[1], [0], [0], [1], [0, 0, 1, 1], [], []>} : vector<8x64xf32>, vector<64x128xf32>, vector<8x128xf32> -> vector<8x128xf32>
    %154 = arith.addf %153, %22 : vector<8x128xf32>
    %155 = arith.negf %154 : vector<8x128xf32>
    %156 = math.exp %155 : vector<8x128xf32>
    %cst_44 = arith.constant 1.000000e+00 : f32
    %157 = vector.broadcast %cst_44 : f32 to vector<8x128xf32>
    %158 = arith.addf %157, %156 : vector<8x128xf32>
    %159 = arith.divf %157, %158 : vector<8x128xf32>
    %160 = vector.extract_strided_slice %159 {offsets = [0, 0], sizes = [8, 32], strides = [1, 1]} : vector<8x128xf32> to vector<8x32xf32>
    %161 = vector.extract_strided_slice %159 {offsets = [0, 32], sizes = [8, 32], strides = [1, 1]} : vector<8x128xf32> to vector<8x32xf32>
    %162 = vector.extract_strided_slice %159 {offsets = [0, 64], sizes = [8, 32], strides = [1, 1]} : vector<8x128xf32> to vector<8x32xf32>
    %cst_45 = arith.constant 2.000000e+00 : f32
    %163 = vector.broadcast %cst_45 : f32 to vector<8x32xf32>
    %164 = arith.mulf %163, %162 : vector<8x32xf32>
    %cst_46 = arith.constant 1.000000e+00 : f32
    %165 = vector.broadcast %cst_46 : f32 to vector<8x32xf32>
    %166 = arith.subf %164, %165 : vector<8x32xf32>
    %167 = vector.extract_strided_slice %159 {offsets = [0, 96], sizes = [8, 32], strides = [1, 1]} : vector<8x128xf32> to vector<8x32xf32>
    %168 = arith.mulf %161, %126 : vector<8x32xf32>
    %169 = arith.mulf %160, %166 : vector<8x32xf32>
    %170 = arith.addf %168, %169 : vector<8x32xf32>
    %171 = math.tanh %170 : vector<8x32xf32>
    %172 = arith.mulf %167, %171 : vector<8x32xf32>
    %173 = vector.extract_strided_slice %14 {offsets = [64, 0], sizes = [32, 4], strides = [1, 1]} : vector<256x4xf32> to vector<32x4xf32>
    %cst_47 = arith.constant dense<0.000000e+00> : vector<8x4xf32>
    %174 = tpu.matmul %172, %173, %cst_47 {dimension_numbers = #tpu.dot_dimension_numbers<[1], [0], [0], [1], [0, 0, 1, 1], [], []>} : vector<8x32xf32>, vector<32x4xf32>, vector<8x4xf32> -> vector<8x4xf32>
    %175 = arith.addf %131, %174 : vector<8x4xf32>
    %cst_48 = arith.constant dense<0.000000e+00> : vector<8x128xf32>
    %176 = tpu.matmul %151, %18, %cst_48 {dimension_numbers = #tpu.dot_dimension_numbers<[1], [0], [0], [1], [0, 0, 1, 1], [], []>} : vector<8x32xf32>, vector<32x128xf32>, vector<8x128xf32> -> vector<8x128xf32>
    %177 = arith.addf %10, %176 : vector<8x128xf32>
    %178 = arith.negf %177 : vector<8x128xf32>
    %179 = math.exp %178 : vector<8x128xf32>
    %cst_49 = arith.constant 1.000000e+00 : f32
    %180 = vector.broadcast %cst_49 : f32 to vector<8x128xf32>
    %181 = arith.addf %180, %179 : vector<8x128xf32>
    %182 = arith.divf %180, %181 : vector<8x128xf32>
    %183 = vector.extract_strided_slice %182 {offsets = [0, 0], sizes = [8, 32], strides = [1, 1]} : vector<8x128xf32> to vector<8x32xf32>
    %184 = vector.extract_strided_slice %182 {offsets = [0, 32], sizes = [8, 32], strides = [1, 1]} : vector<8x128xf32> to vector<8x32xf32>
    %185 = vector.extract_strided_slice %182 {offsets = [0, 64], sizes = [8, 32], strides = [1, 1]} : vector<8x128xf32> to vector<8x32xf32>
    %cst_50 = arith.constant 2.000000e+00 : f32
    %186 = vector.broadcast %cst_50 : f32 to vector<8x32xf32>
    %187 = arith.mulf %186, %185 : vector<8x32xf32>
    %cst_51 = arith.constant 1.000000e+00 : f32
    %188 = vector.broadcast %cst_51 : f32 to vector<8x32xf32>
    %189 = arith.subf %187, %188 : vector<8x32xf32>
    %190 = vector.extract_strided_slice %182 {offsets = [0, 96], sizes = [8, 32], strides = [1, 1]} : vector<8x128xf32> to vector<8x32xf32>
    %191 = arith.mulf %184, %149 : vector<8x32xf32>
    %192 = arith.mulf %183, %189 : vector<8x32xf32>
    %193 = arith.addf %191, %192 : vector<8x32xf32>
    %194 = math.tanh %193 : vector<8x32xf32>
    %195 = arith.mulf %190, %194 : vector<8x32xf32>
    %196 = tpu.concatenate %151, %172 in 1 : vector<8x32xf32>, vector<8x32xf32> -> vector<8x64xf32>
    %cst_52 = arith.constant dense<0.000000e+00> : vector<8x128xf32>
    %197 = tpu.matmul %196, %19, %cst_52 {dimension_numbers = #tpu.dot_dimension_numbers<[1], [0], [0], [1], [0, 0, 1, 1], [], []>} : vector<8x64xf32>, vector<64x128xf32>, vector<8x128xf32> -> vector<8x128xf32>
    %198 = arith.addf %197, %22 : vector<8x128xf32>
    %199 = arith.negf %198 : vector<8x128xf32>
    %200 = math.exp %199 : vector<8x128xf32>
    %cst_53 = arith.constant 1.000000e+00 : f32
    %201 = vector.broadcast %cst_53 : f32 to vector<8x128xf32>
    %202 = arith.addf %201, %200 : vector<8x128xf32>
    %203 = arith.divf %201, %202 : vector<8x128xf32>
    %204 = vector.extract_strided_slice %203 {offsets = [0, 0], sizes = [8, 32], strides = [1, 1]} : vector<8x128xf32> to vector<8x32xf32>
    %205 = vector.extract_strided_slice %203 {offsets = [0, 32], sizes = [8, 32], strides = [1, 1]} : vector<8x128xf32> to vector<8x32xf32>
    %206 = vector.extract_strided_slice %203 {offsets = [0, 64], sizes = [8, 32], strides = [1, 1]} : vector<8x128xf32> to vector<8x32xf32>
    %cst_54 = arith.constant 2.000000e+00 : f32
    %207 = vector.broadcast %cst_54 : f32 to vector<8x32xf32>
    %208 = arith.mulf %207, %206 : vector<8x32xf32>
    %cst_55 = arith.constant 1.000000e+00 : f32
    %209 = vector.broadcast %cst_55 : f32 to vector<8x32xf32>
    %210 = arith.subf %208, %209 : vector<8x32xf32>
    %211 = vector.extract_strided_slice %203 {offsets = [0, 96], sizes = [8, 32], strides = [1, 1]} : vector<8x128xf32> to vector<8x32xf32>
    %212 = arith.mulf %205, %170 : vector<8x32xf32>
    %213 = arith.mulf %204, %210 : vector<8x32xf32>
    %214 = arith.addf %212, %213 : vector<8x32xf32>
    %215 = math.tanh %214 : vector<8x32xf32>
    %216 = arith.mulf %211, %215 : vector<8x32xf32>
    %217 = vector.extract_strided_slice %14 {offsets = [96, 0], sizes = [32, 4], strides = [1, 1]} : vector<256x4xf32> to vector<32x4xf32>
    %cst_56 = arith.constant dense<0.000000e+00> : vector<8x4xf32>
    %218 = tpu.matmul %216, %217, %cst_56 {dimension_numbers = #tpu.dot_dimension_numbers<[1], [0], [0], [1], [0, 0, 1, 1], [], []>} : vector<8x32xf32>, vector<32x4xf32>, vector<8x4xf32> -> vector<8x4xf32>
    %219 = arith.addf %175, %218 : vector<8x4xf32>
    %cst_57 = arith.constant dense<0.000000e+00> : vector<8x128xf32>
    %220 = tpu.matmul %195, %18, %cst_57 {dimension_numbers = #tpu.dot_dimension_numbers<[1], [0], [0], [1], [0, 0, 1, 1], [], []>} : vector<8x32xf32>, vector<32x128xf32>, vector<8x128xf32> -> vector<8x128xf32>
    %221 = arith.addf %11, %220 : vector<8x128xf32>
    %222 = arith.negf %221 : vector<8x128xf32>
    %223 = math.exp %222 : vector<8x128xf32>
    %cst_58 = arith.constant 1.000000e+00 : f32
    %224 = vector.broadcast %cst_58 : f32 to vector<8x128xf32>
    %225 = arith.addf %224, %223 : vector<8x128xf32>
    %226 = arith.divf %224, %225 : vector<8x128xf32>
    %227 = vector.extract_strided_slice %226 {offsets = [0, 0], sizes = [8, 32], strides = [1, 1]} : vector<8x128xf32> to vector<8x32xf32>
    %228 = vector.extract_strided_slice %226 {offsets = [0, 32], sizes = [8, 32], strides = [1, 1]} : vector<8x128xf32> to vector<8x32xf32>
    %229 = vector.extract_strided_slice %226 {offsets = [0, 64], sizes = [8, 32], strides = [1, 1]} : vector<8x128xf32> to vector<8x32xf32>
    %cst_59 = arith.constant 2.000000e+00 : f32
    %230 = vector.broadcast %cst_59 : f32 to vector<8x32xf32>
    %231 = arith.mulf %230, %229 : vector<8x32xf32>
    %cst_60 = arith.constant 1.000000e+00 : f32
    %232 = vector.broadcast %cst_60 : f32 to vector<8x32xf32>
    %233 = arith.subf %231, %232 : vector<8x32xf32>
    %234 = vector.extract_strided_slice %226 {offsets = [0, 96], sizes = [8, 32], strides = [1, 1]} : vector<8x128xf32> to vector<8x32xf32>
    %235 = arith.mulf %228, %193 : vector<8x32xf32>
    %236 = arith.mulf %227, %233 : vector<8x32xf32>
    %237 = arith.addf %235, %236 : vector<8x32xf32>
    %238 = math.tanh %237 : vector<8x32xf32>
    %239 = arith.mulf %234, %238 : vector<8x32xf32>
    %240 = tpu.concatenate %195, %216 in 1 : vector<8x32xf32>, vector<8x32xf32> -> vector<8x64xf32>
    %cst_61 = arith.constant dense<0.000000e+00> : vector<8x128xf32>
    %241 = tpu.matmul %240, %19, %cst_61 {dimension_numbers = #tpu.dot_dimension_numbers<[1], [0], [0], [1], [0, 0, 1, 1], [], []>} : vector<8x64xf32>, vector<64x128xf32>, vector<8x128xf32> -> vector<8x128xf32>
    %242 = arith.addf %241, %22 : vector<8x128xf32>
    %243 = arith.negf %242 : vector<8x128xf32>
    %244 = math.exp %243 : vector<8x128xf32>
    %cst_62 = arith.constant 1.000000e+00 : f32
    %245 = vector.broadcast %cst_62 : f32 to vector<8x128xf32>
    %246 = arith.addf %245, %244 : vector<8x128xf32>
    %247 = arith.divf %245, %246 : vector<8x128xf32>
    %248 = vector.extract_strided_slice %247 {offsets = [0, 0], sizes = [8, 32], strides = [1, 1]} : vector<8x128xf32> to vector<8x32xf32>
    %249 = vector.extract_strided_slice %247 {offsets = [0, 32], sizes = [8, 32], strides = [1, 1]} : vector<8x128xf32> to vector<8x32xf32>
    %250 = vector.extract_strided_slice %247 {offsets = [0, 64], sizes = [8, 32], strides = [1, 1]} : vector<8x128xf32> to vector<8x32xf32>
    %cst_63 = arith.constant 2.000000e+00 : f32
    %251 = vector.broadcast %cst_63 : f32 to vector<8x32xf32>
    %252 = arith.mulf %251, %250 : vector<8x32xf32>
    %cst_64 = arith.constant 1.000000e+00 : f32
    %253 = vector.broadcast %cst_64 : f32 to vector<8x32xf32>
    %254 = arith.subf %252, %253 : vector<8x32xf32>
    %255 = vector.extract_strided_slice %247 {offsets = [0, 96], sizes = [8, 32], strides = [1, 1]} : vector<8x128xf32> to vector<8x32xf32>
    %256 = arith.mulf %249, %214 : vector<8x32xf32>
    %257 = arith.mulf %248, %254 : vector<8x32xf32>
    %258 = arith.addf %256, %257 : vector<8x32xf32>
    %259 = math.tanh %258 : vector<8x32xf32>
    %260 = arith.mulf %255, %259 : vector<8x32xf32>
    %261 = vector.extract_strided_slice %14 {offsets = [128, 0], sizes = [32, 4], strides = [1, 1]} : vector<256x4xf32> to vector<32x4xf32>
    %cst_65 = arith.constant dense<0.000000e+00> : vector<8x4xf32>
    %262 = tpu.matmul %260, %261, %cst_65 {dimension_numbers = #tpu.dot_dimension_numbers<[1], [0], [0], [1], [0, 0, 1, 1], [], []>} : vector<8x32xf32>, vector<32x4xf32>, vector<8x4xf32> -> vector<8x4xf32>
    %263 = arith.addf %219, %262 : vector<8x4xf32>
    %cst_66 = arith.constant dense<0.000000e+00> : vector<8x128xf32>
    %264 = tpu.matmul %239, %18, %cst_66 {dimension_numbers = #tpu.dot_dimension_numbers<[1], [0], [0], [1], [0, 0, 1, 1], [], []>} : vector<8x32xf32>, vector<32x128xf32>, vector<8x128xf32> -> vector<8x128xf32>
    %265 = arith.addf %12, %264 : vector<8x128xf32>
    %266 = arith.negf %265 : vector<8x128xf32>
    %267 = math.exp %266 : vector<8x128xf32>
    %cst_67 = arith.constant 1.000000e+00 : f32
    %268 = vector.broadcast %cst_67 : f32 to vector<8x128xf32>
    %269 = arith.addf %268, %267 : vector<8x128xf32>
    %270 = arith.divf %268, %269 : vector<8x128xf32>
    %271 = vector.extract_strided_slice %270 {offsets = [0, 0], sizes = [8, 32], strides = [1, 1]} : vector<8x128xf32> to vector<8x32xf32>
    %272 = vector.extract_strided_slice %270 {offsets = [0, 32], sizes = [8, 32], strides = [1, 1]} : vector<8x128xf32> to vector<8x32xf32>
    %273 = vector.extract_strided_slice %270 {offsets = [0, 64], sizes = [8, 32], strides = [1, 1]} : vector<8x128xf32> to vector<8x32xf32>
    %cst_68 = arith.constant 2.000000e+00 : f32
    %274 = vector.broadcast %cst_68 : f32 to vector<8x32xf32>
    %275 = arith.mulf %274, %273 : vector<8x32xf32>
    %cst_69 = arith.constant 1.000000e+00 : f32
    %276 = vector.broadcast %cst_69 : f32 to vector<8x32xf32>
    %277 = arith.subf %275, %276 : vector<8x32xf32>
    %278 = vector.extract_strided_slice %270 {offsets = [0, 96], sizes = [8, 32], strides = [1, 1]} : vector<8x128xf32> to vector<8x32xf32>
    %279 = arith.mulf %272, %237 : vector<8x32xf32>
    %280 = arith.mulf %271, %277 : vector<8x32xf32>
    %281 = arith.addf %279, %280 : vector<8x32xf32>
    %282 = math.tanh %281 : vector<8x32xf32>
    %283 = arith.mulf %278, %282 : vector<8x32xf32>
    %284 = tpu.concatenate %239, %260 in 1 : vector<8x32xf32>, vector<8x32xf32> -> vector<8x64xf32>
    %cst_70 = arith.constant dense<0.000000e+00> : vector<8x128xf32>
    %285 = tpu.matmul %284, %19, %cst_70 {dimension_numbers = #tpu.dot_dimension_numbers<[1], [0], [0], [1], [0, 0, 1, 1], [], []>} : vector<8x64xf32>, vector<64x128xf32>, vector<8x128xf32> -> vector<8x128xf32>
    %286 = arith.addf %285, %22 : vector<8x128xf32>
    %287 = arith.negf %286 : vector<8x128xf32>
    %288 = math.exp %287 : vector<8x128xf32>
    %cst_71 = arith.constant 1.000000e+00 : f32
    %289 = vector.broadcast %cst_71 : f32 to vector<8x128xf32>
    %290 = arith.addf %289, %288 : vector<8x128xf32>
    %291 = arith.divf %289, %290 : vector<8x128xf32>
    %292 = vector.extract_strided_slice %291 {offsets = [0, 0], sizes = [8, 32], strides = [1, 1]} : vector<8x128xf32> to vector<8x32xf32>
    %293 = vector.extract_strided_slice %291 {offsets = [0, 32], sizes = [8, 32], strides = [1, 1]} : vector<8x128xf32> to vector<8x32xf32>
    %294 = vector.extract_strided_slice %291 {offsets = [0, 64], sizes = [8, 32], strides = [1, 1]} : vector<8x128xf32> to vector<8x32xf32>
    %cst_72 = arith.constant 2.000000e+00 : f32
    %295 = vector.broadcast %cst_72 : f32 to vector<8x32xf32>
    %296 = arith.mulf %295, %294 : vector<8x32xf32>
    %cst_73 = arith.constant 1.000000e+00 : f32
    %297 = vector.broadcast %cst_73 : f32 to vector<8x32xf32>
    %298 = arith.subf %296, %297 : vector<8x32xf32>
    %299 = vector.extract_strided_slice %291 {offsets = [0, 96], sizes = [8, 32], strides = [1, 1]} : vector<8x128xf32> to vector<8x32xf32>
    %300 = arith.mulf %293, %258 : vector<8x32xf32>
    %301 = arith.mulf %292, %298 : vector<8x32xf32>
    %302 = arith.addf %300, %301 : vector<8x32xf32>
    %303 = math.tanh %302 : vector<8x32xf32>
    %304 = arith.mulf %299, %303 : vector<8x32xf32>
    %305 = vector.extract_strided_slice %14 {offsets = [160, 0], sizes = [32, 4], strides = [1, 1]} : vector<256x4xf32> to vector<32x4xf32>
    %cst_74 = arith.constant dense<0.000000e+00> : vector<8x4xf32>
    %306 = tpu.matmul %304, %305, %cst_74 {dimension_numbers = #tpu.dot_dimension_numbers<[1], [0], [0], [1], [0, 0, 1, 1], [], []>} : vector<8x32xf32>, vector<32x4xf32>, vector<8x4xf32> -> vector<8x4xf32>
    %307 = arith.addf %263, %306 : vector<8x4xf32>
    %cst_75 = arith.constant dense<0.000000e+00> : vector<8x128xf32>
    %308 = tpu.matmul %283, %18, %cst_75 {dimension_numbers = #tpu.dot_dimension_numbers<[1], [0], [0], [1], [0, 0, 1, 1], [], []>} : vector<8x32xf32>, vector<32x128xf32>, vector<8x128xf32> -> vector<8x128xf32>
    %309 = arith.addf %13, %308 : vector<8x128xf32>
    %310 = arith.negf %309 : vector<8x128xf32>
    %311 = math.exp %310 : vector<8x128xf32>
    %cst_76 = arith.constant 1.000000e+00 : f32
    %312 = vector.broadcast %cst_76 : f32 to vector<8x128xf32>
    %313 = arith.addf %312, %311 : vector<8x128xf32>
    %314 = arith.divf %312, %313 : vector<8x128xf32>
    %315 = vector.extract_strided_slice %314 {offsets = [0, 0], sizes = [8, 32], strides = [1, 1]} : vector<8x128xf32> to vector<8x32xf32>
    %316 = vector.extract_strided_slice %314 {offsets = [0, 32], sizes = [8, 32], strides = [1, 1]} : vector<8x128xf32> to vector<8x32xf32>
    %317 = vector.extract_strided_slice %314 {offsets = [0, 64], sizes = [8, 32], strides = [1, 1]} : vector<8x128xf32> to vector<8x32xf32>
    %cst_77 = arith.constant 2.000000e+00 : f32
    %318 = vector.broadcast %cst_77 : f32 to vector<8x32xf32>
    %319 = arith.mulf %318, %317 : vector<8x32xf32>
    %cst_78 = arith.constant 1.000000e+00 : f32
    %320 = vector.broadcast %cst_78 : f32 to vector<8x32xf32>
    %321 = arith.subf %319, %320 : vector<8x32xf32>
    %322 = vector.extract_strided_slice %314 {offsets = [0, 96], sizes = [8, 32], strides = [1, 1]} : vector<8x128xf32> to vector<8x32xf32>
    %323 = arith.mulf %316, %281 : vector<8x32xf32>
    %324 = arith.mulf %315, %321 : vector<8x32xf32>
    %325 = arith.addf %323, %324 : vector<8x32xf32>
    %326 = math.tanh %325 : vector<8x32xf32>
    %327 = arith.mulf %322, %326 : vector<8x32xf32>
    %328 = tpu.concatenate %283, %304 in 1 : vector<8x32xf32>, vector<8x32xf32> -> vector<8x64xf32>
    %cst_79 = arith.constant dense<0.000000e+00> : vector<8x128xf32>
    %329 = tpu.matmul %328, %19, %cst_79 {dimension_numbers = #tpu.dot_dimension_numbers<[1], [0], [0], [1], [0, 0, 1, 1], [], []>} : vector<8x64xf32>, vector<64x128xf32>, vector<8x128xf32> -> vector<8x128xf32>
    %330 = arith.addf %329, %22 : vector<8x128xf32>
    %331 = arith.negf %330 : vector<8x128xf32>
    %332 = math.exp %331 : vector<8x128xf32>
    %cst_80 = arith.constant 1.000000e+00 : f32
    %333 = vector.broadcast %cst_80 : f32 to vector<8x128xf32>
    %334 = arith.addf %333, %332 : vector<8x128xf32>
    %335 = arith.divf %333, %334 : vector<8x128xf32>
    %336 = vector.extract_strided_slice %335 {offsets = [0, 0], sizes = [8, 32], strides = [1, 1]} : vector<8x128xf32> to vector<8x32xf32>
    %337 = vector.extract_strided_slice %335 {offsets = [0, 32], sizes = [8, 32], strides = [1, 1]} : vector<8x128xf32> to vector<8x32xf32>
    %338 = vector.extract_strided_slice %335 {offsets = [0, 64], sizes = [8, 32], strides = [1, 1]} : vector<8x128xf32> to vector<8x32xf32>
    %cst_81 = arith.constant 2.000000e+00 : f32
    %339 = vector.broadcast %cst_81 : f32 to vector<8x32xf32>
    %340 = arith.mulf %339, %338 : vector<8x32xf32>
    %cst_82 = arith.constant 1.000000e+00 : f32
    %341 = vector.broadcast %cst_82 : f32 to vector<8x32xf32>
    %342 = arith.subf %340, %341 : vector<8x32xf32>
    %343 = vector.extract_strided_slice %335 {offsets = [0, 96], sizes = [8, 32], strides = [1, 1]} : vector<8x128xf32> to vector<8x32xf32>
    %344 = arith.mulf %337, %302 : vector<8x32xf32>
    %345 = arith.mulf %336, %342 : vector<8x32xf32>
    %346 = arith.addf %344, %345 : vector<8x32xf32>
    %347 = math.tanh %346 : vector<8x32xf32>
    %348 = arith.mulf %343, %347 : vector<8x32xf32>
    %349 = vector.extract_strided_slice %14 {offsets = [192, 0], sizes = [32, 4], strides = [1, 1]} : vector<256x4xf32> to vector<32x4xf32>
    %cst_83 = arith.constant dense<0.000000e+00> : vector<8x4xf32>
    %350 = tpu.matmul %348, %349, %cst_83 {dimension_numbers = #tpu.dot_dimension_numbers<[1], [0], [0], [1], [0, 0, 1, 1], [], []>} : vector<8x32xf32>, vector<32x4xf32>, vector<8x4xf32> -> vector<8x4xf32>
    %351 = arith.addf %307, %350 : vector<8x4xf32>
    %352 = tpu.concatenate %327, %348 in 1 : vector<8x32xf32>, vector<8x32xf32> -> vector<8x64xf32>
    %cst_84 = arith.constant dense<0.000000e+00> : vector<8x128xf32>
    %353 = tpu.matmul %352, %19, %cst_84 {dimension_numbers = #tpu.dot_dimension_numbers<[1], [0], [0], [1], [0, 0, 1, 1], [], []>} : vector<8x64xf32>, vector<64x128xf32>, vector<8x128xf32> -> vector<8x128xf32>
    %354 = arith.addf %353, %22 : vector<8x128xf32>
    %355 = arith.negf %354 : vector<8x128xf32>
    %356 = math.exp %355 : vector<8x128xf32>
    %cst_85 = arith.constant 1.000000e+00 : f32
    %357 = vector.broadcast %cst_85 : f32 to vector<8x128xf32>
    %358 = arith.addf %357, %356 : vector<8x128xf32>
    %359 = arith.divf %357, %358 : vector<8x128xf32>
    %360 = vector.extract_strided_slice %359 {offsets = [0, 0], sizes = [8, 32], strides = [1, 1]} : vector<8x128xf32> to vector<8x32xf32>
    %361 = vector.extract_strided_slice %359 {offsets = [0, 32], sizes = [8, 32], strides = [1, 1]} : vector<8x128xf32> to vector<8x32xf32>
    %362 = vector.extract_strided_slice %359 {offsets = [0, 64], sizes = [8, 32], strides = [1, 1]} : vector<8x128xf32> to vector<8x32xf32>
    %cst_86 = arith.constant 2.000000e+00 : f32
    %363 = vector.broadcast %cst_86 : f32 to vector<8x32xf32>
    %364 = arith.mulf %363, %362 : vector<8x32xf32>
    %cst_87 = arith.constant 1.000000e+00 : f32
    %365 = vector.broadcast %cst_87 : f32 to vector<8x32xf32>
    %366 = arith.subf %364, %365 : vector<8x32xf32>
    %367 = vector.extract_strided_slice %359 {offsets = [0, 96], sizes = [8, 32], strides = [1, 1]} : vector<8x128xf32> to vector<8x32xf32>
    %368 = arith.mulf %361, %346 : vector<8x32xf32>
    %369 = arith.mulf %360, %366 : vector<8x32xf32>
    %370 = arith.addf %368, %369 : vector<8x32xf32>
    %371 = math.tanh %370 : vector<8x32xf32>
    %372 = arith.mulf %367, %371 : vector<8x32xf32>
    %373 = vector.extract_strided_slice %14 {offsets = [224, 0], sizes = [32, 4], strides = [1, 1]} : vector<256x4xf32> to vector<32x4xf32>
    %cst_88 = arith.constant dense<0.000000e+00> : vector<8x4xf32>
    %374 = tpu.matmul %372, %373, %cst_88 {dimension_numbers = #tpu.dot_dimension_numbers<[1], [0], [0], [1], [0, 0, 1, 1], [], []>} : vector<8x32xf32>, vector<32x4xf32>, vector<8x4xf32> -> vector<8x4xf32>
    %375 = arith.addf %351, %374 : vector<8x4xf32>
    %c0_89 = arith.constant 0 : index
    %c0_90 = arith.constant 0 : index
    %376 = vector.load %arg8[%c0_89, %c0_90] : memref<8x4xf32, #tpu.memory_space<vmem>>, vector<8x4xf32>
    tpu.vector_store %arg8[%c0_89, %c0_90], %375 {strides = array<i32>} : memref<8x4xf32, #tpu.memory_space<vmem>>, vector<8x4xf32>,
    return
  }
}

</mosaic_0001>

<llo_original>
// kernel: fire_predictor_forward.1
$region0: #{fire_predictor_forward.1}
  #allocation0 [shape = 'u32[]', space=smem, size = 0x4, offset = 0x4, fixed_abs, tag = 'smem constant byte address 0x4 - core index']
  #allocation1 [shape = 'u32[72,128]{1,0:T(1,128)}', space=vmem, size = 0x9000, scoped, tag = 'internal scratch']
  %s0 = inlined_call_operand.vmem [shape: f32[64,4], index: 0, kind: input, shape index: {}]
  %s1 = inlined_call_operand.vmem [shape: f32[4,128], index: 1, kind: input, shape index: {}]
  %s2 = inlined_call_operand.vmem [shape: f32[1,128], index: 2, kind: input, shape index: {}]
  %s3 = inlined_call_operand.vmem [shape: f32[32,128], index: 3, kind: input, shape index: {}]
  %s4 = inlined_call_operand.vmem [shape: f32[64,128], index: 4, kind: input, shape index: {}]
  %s5 = inlined_call_operand.vmem [shape: f32[1,128], index: 5, kind: input, shape index: {}]
  %s6 = inlined_call_operand.vmem [shape: f32[256,4], index: 6, kind: input, shape index: {}]
  %s7 = inlined_call_operand.vmem [shape: f32[1,4], index: 7, kind: input, shape index: {}]
  %s8 = inlined_call_operand.vmem [shape: f32[8,4], index: 8, kind: output, shape index: {}]
  %s9 = sld [smem:[#allocation0]]
  $region42: #{fire_predictor_forward.1} parent=0
    _
  %s11 = ssub.s32 1, %s9
  %s12 = scalar_select 0, %s11, %s9
  // Predicated region
  $region2: #{fire_predictor_forward.1} parent=0 // pred_check
    _
  $region3: #{fire_predictor_forward.1} parent=0 // pred_check_branch
    %14 = sbr.rel (0) target = $region5
  $region4: #{fire_predictor_forward.1} parent=0 // pred_region
    _
  $region5: #{fire_predictor_forward.1} parent=0 // pred_fallthru
    _
  // Predicated region
  $region6: #{fire_predictor_forward.1} parent=0 // pred_check
    _
  $region7: #{fire_predictor_forward.1} parent=0 // pred_check_branch
    %16 = sbr.rel (0) target = $region9
  $region8: #{fire_predictor_forward.1} parent=0 // pred_region
    _
  $region9: #{fire_predictor_forward.1} parent=0 // pred_fallthru
    _
  // Predicated region
  $region10: #{fire_predictor_forward.1} parent=0 // pred_check
    _
  $region11: #{fire_predictor_forward.1} parent=0 // pred_check_branch
    %18 = sbr.rel (0) target = $region13
  $region12: #{fire_predictor_forward.1} parent=0 // pred_region
    _
  $region13: #{fire_predictor_forward.1} parent=0 // pred_fallthru
    _
  // Predicated region
  $region14: #{fire_predictor_forward.1} parent=0 // pred_check
    _
  $region15: #{fire_predictor_forward.1} parent=0 // pred_check_branch
    %20 = sbr.rel (0) target = $region17
  $region16: #{fire_predictor_forward.1} parent=0 // pred_region
    _
  $region17: #{fire_predictor_forward.1} parent=0 // pred_fallthru
    _
  // Predicated region
  $region18: #{fire_predictor_forward.1} parent=0 // pred_check
    _
  $region19: #{fire_predictor_forward.1} parent=0 // pred_check_branch
    %22 = sbr.rel (0) target = $region21
  $region20: #{fire_predictor_forward.1} parent=0 // pred_region
    _
  $region21: #{fire_predictor_forward.1} parent=0 // pred_fallthru
    _
  // Predicated region
  $region22: #{fire_predictor_forward.1} parent=0 // pred_check
    _
  $region23: #{fire_predictor_forward.1} parent=0 // pred_check_branch
    %24 = sbr.rel (0) target = $region25
  $region24: #{fire_predictor_forward.1} parent=0 // pred_region
    _
  $region25: #{fire_predictor_forward.1} parent=0 // pred_fallthru
    _
  // Predicated region
  $region26: #{fire_predictor_forward.1} parent=0 // pred_check
    _
  $region27: #{fire_predictor_forward.1} parent=0 // pred_check_branch
    %26 = sbr.rel (0) target = $region29
  $region28: #{fire_predictor_forward.1} parent=0 // pred_region
    _
  $region29: #{fire_predictor_forward.1} parent=0 // pred_fallthru
    _
  // Predicated region
  $region30: #{fire_predictor_forward.1} parent=0 // pred_check
    _
  $region31: #{fire_predictor_forward.1} parent=0 // pred_check_branch
    %28 = sbr.rel (0) target = $region33
  $region32: #{fire_predictor_forward.1} parent=0 // pred_region
    _
  $region33: #{fire_predictor_forward.1} parent=0 // pred_fallthru
    _
  %v29 = vld [vmem:[%s0] sm:$0xff]
  %v30 = vld [vmem:[%s0 + $0x8] sm:$0xff]
  %v31 = vld [vmem:[%s0 + $0x10] sm:$0xff]
  %v32 = vld [vmem:[%s0 + $0x18] sm:$0xff]
  %v33 = vld [vmem:[%s0 + $0x20] sm:$0xff]
  %v34 = vld [vmem:[%s0 + $0x28] sm:$0xff]
  %v35 = vld [vmem:[%s0 + $0x30] sm:$0xff]
  %v36 = vld [vmem:[%s0 + $0x38] sm:$0xff]
  %v37 = vld [vmem:[%s1] sm:$0xf]
  %v38 = vld [vmem:[%s2] sm:$0x1]
  %v40 = vperm.slane %v38, 0
  %vm42 = vcmask 31744
  %v44 = vsel %vm42, %v29, 0
  %v47 = vsel %vm42, %v30, 0
  %v50 = vsel %vm42, %v31, 0
  %v53 = vsel %vm42, %v32, 0
  %v56 = vsel %vm42, %v33, 0
  %v59 = vsel %vm42, %v34, 0
  %v62 = vsel %vm42, %v35, 0
  %v65 = vsel %vm42, %v36, 0
  %vm67 = vcmask 1043456
  %v69 = vsel %vm67, %v37, 0
  %71 = vmatpush.msra.mxu0 0.0
  %72 = vmatpush.msra.mxu0 0.0
  %73 = vmatpush.msra.mxu0 0.0
  %74 = vmatpush.msra.mxu0 0.0
  %75 = vmatpush.msra.mxu0 0.0
  %76 = vmatpush.msra.mxu0 0.0
  %77 = vmatpush.msra.mxu0 0.0
  %78 = vmatpush.msra.mxu0 0.0
  %79 = vmatpush.msra.mxu0 0.0
  %80 = vmatpush.msra.mxu0 0.0
  %81 = vmatpush.msra.mxu0 0.0
  %82 = vmatpush.msra.mxu0 0.0
  %83 = vmatpush.msra.mxu0 0.0
  %84 = vmatpush.msra.mxu0 0.0
  %85 = vmatpush.msra.mxu0 0.0
  %86 = vmatpush.msra.mxu0 %v69
  %87 = vmatmul.f32.gmra.mxu0 %v44
  %v88 = vpop.f32.mrf.mxu0
  %v89 = vadd.f32 %v40, %v88
  %90 = vmatmul.f32.gmra.mxu0 %v47
  %v91 = vpop.f32.mrf.mxu0
  %v92 = vadd.f32 %v40, %v91
  %93 = vmatmul.f32.gmra.mxu0 %v50
  %v94 = vpop.f32.mrf.mxu0
  %v95 = vadd.f32 %v40, %v94
  %96 = vmatmul.f32.gmra.mxu0 %v53
  %v97 = vpop.f32.mrf.mxu0
  %v98 = vadd.f32 %v40, %v97
  %99 = vmatmul.f32.gmra.mxu0 %v56
  %v100 = vpop.f32.mrf.mxu0
  %v101 = vadd.f32 %v40, %v100
  %102 = vmatmul.f32.gmra.mxu0 %v59
  %v103 = vpop.f32.mrf.mxu0
  %v104 = vadd.f32 %v40, %v103
  %105 = vmatmul.f32.gmra.mxu0 %v62
  %v106 = vpop.f32.mrf.mxu0
  %v107 = vadd.f32 %v40, %v106
  %108 = vmatmul.f32.gmra.mxu0 %v65
  %v109 = vpop.f32.mrf.mxu0
  %v110 = vadd.f32 %v40, %v109
  %111 = vdwg.mxu0
  %v112 = vld [vmem:[%s6] sm:$0xff]
  %v113 = vld [vmem:[%s6 + $0x8] sm:$0xff]
  %v114 = vld [vmem:[%s6 + $0x10] sm:$0xff]
  %v115 = vld [vmem:[%s6 + $0x18] sm:$0xff]
  %v116 = vld [vmem:[%s6 + $0x20] sm:$0xff]
  %v117 = vld [vmem:[%s6 + $0x28] sm:$0xff]
  %v118 = vld [vmem:[%s6 + $0x30] sm:$0xff]
  %v119 = vld [vmem:[%s6 + $0x38] sm:$0xff]
  %v120 = vld [vmem:[%s6 + $0x40] sm:$0xff]
  %v121 = vld [vmem:[%s6 + $0x48] sm:$0xff]
  %v122 = vld [vmem:[%s6 + $0x50] sm:$0xff]
  %v123 = vld [vmem:[%s6 + $0x58] sm:$0xff]
  %v124 = vld [vmem:[%s6 + $0x60] sm:$0xff]
  %v125 = vld [vmem:[%s6 + $0x68] sm:$0xff]
  %v126 = vld [vmem:[%s6 + $0x70] sm:$0xff]
  %v127 = vld [vmem:[%s6 + $0x78] sm:$0xff]
  %v128 = vld [vmem:[%s6 + $0x80] sm:$0xff]
  %v129 = vld [vmem:[%s6 + $0x88] sm:$0xff]
  %v130 = vld [vmem:[%s6 + $0x90] sm:$0xff]
  %v131 = vld [vmem:[%s6 + $0x98] sm:$0xff]
  %v132 = vld [vmem:[%s6 + $0xa0] sm:$0xff]
  %v133 = vld [vmem:[%s6 + $0xa8] sm:$0xff]
  %v134 = vld [vmem:[%s6 + $0xb0] sm:$0xff]
  %v135 = vld [vmem:[%s6 + $0xb8] sm:$0xff]
  %v136 = vld [vmem:[%s6 + $0xc0] sm:$0xff]
  %v137 = vld [vmem:[%s6 + $0xc8] sm:$0xff]
  %v138 = vld [vmem:[%s6 + $0xd0] sm:$0xff]
  %v139 = vld [vmem:[%s6 + $0xd8] sm:$0xff]
  %v140 = vld [vmem:[%s6 + $0xe0] sm:$0xff]
  %v141 = vld [vmem:[%s6 + $0xe8] sm:$0xff]
  %v142 = vld [vmem:[%s6 + $0xf0] sm:$0xff]
  %v143 = vld [vmem:[%s6 + $0xf8] sm:$0xff]
  %v144 = vld [vmem:[%s7] sm:$0x1]
  %v146 = vperm.slane %v144, 0
  %v148 = vld [vmem:[%s3] sm:$0xff]
  %v149 = vld [vmem:[%s3 + $0x8] sm:$0xff]
  %v150 = vld [vmem:[%s3 + $0x10] sm:$0xff]
  %v151 = vld [vmem:[%s3 + $0x18] sm:$0xff]
  %v152 = vld [vmem:[%s4] sm:$0xff]
  %v153 = vld [vmem:[%s4 + $0x8] sm:$0xff]
  %v154 = vld [vmem:[%s4 + $0x10] sm:$0xff]
  %v155 = vld [vmem:[%s4 + $0x18] sm:$0xff]
  %v156 = vld [vmem:[%s4 + $0x20] sm:$0xff]
  %v157 = vld [vmem:[%s4 + $0x28] sm:$0xff]
  %v158 = vld [vmem:[%s4 + $0x30] sm:$0xff]
  %v159 = vld [vmem:[%s4 + $0x38] sm:$0xff]
  %v160 = vld [vmem:[%s5] sm:$0x1]
  %v162 = vperm.slane %v160, 0
  %v164 = vxor.u32 %v89, 2147483648
  %v165 = vmul.f32 %v164, 1.442695
  %v166 = vpow.pop %v165
  %v167 = vadd.f32 %v166, 1.0
  %v168 = vrcp.pop %v167
  %v169 = vmul.f32 %v167, %v168
  %v170 = vsub.f32 1.0, %v169
  %v171 = vmul.f32 %v168, %v170
  %v172 = vadd.f32 %v168, %v171
  %vm173 = vweird.f32 %v167
  %vm174 = vweird.f32 %v168
  %vm175 = vmor %vm173, %vm174
  %v176 = vsel %vm175, %v168, %v172
  %v177 = vand.u32 2147483647, %v167
  %vm178 = vcmp.eq.f32.partialorder %v177, 8.507059e+37
  %v179 = vand.u32 %v167, 2147483648
  %v180 = vor.u32 1.1754944e-38, %v179
  %v181 = vsel %vm178, %v180, %v176
  %v182 = vmul.f32 1.0, %v181
  %v183 = vmul.f32 %v182, 2.0
  %v184 = vsub.f32 %v183, 1.0
  %v185 = vmul.f32 %v182, 0.0
  %187 = vrot.lane.b32.xlu0 %v184, 64
  %v188 = vpop.permute.xlu0 %187
  %v190 = vmul.f32 %v182, %v188
  %192 = vrot.lane.b32.xlu0 %v190, 32
  %v193 = vpop.permute.xlu0 %192
  %v195 = vadd.f32 %v185, %v193
  %v196 = vtanh.pop %v195
  %198 = vrot.lane.b32.xlu0 %v196, 64
  %v199 = vpop.permute.xlu0 %198
  %v201 = vmul.f32 %v182, %v199
  %203 = vrot.lane.b32.xlu0 %v201, 32
  %v204 = vpop.permute.xlu0 %203
  %vm205 = vcmask 261120
  %v206 = vsel %vm205, %v204, 0
  %208 = vmatpush.msra.mxu0 0.0
  %209 = vmatpush.msra.mxu0 0.0
  %210 = vmatpush.msra.mxu0 0.0
  %211 = vmatpush.msra.mxu0 0.0
  %212 = vmatpush.msra.mxu0 0.0
  %213 = vmatpush.msra.mxu0 0.0
  %214 = vmatpush.msra.mxu0 0.0
  %215 = vmatpush.msra.mxu0 0.0
  %216 = vmatpush.msra.mxu0 0.0
  %217 = vmatpush.msra.mxu0 0.0
  %218 = vmatpush.msra.mxu0 0.0
  %219 = vmatpush.msra.mxu0 0.0
  %220 = vmatpush.msra.mxu0 %v151
  %221 = vmatpush.msra.mxu0 %v150
  %222 = vmatpush.msra.mxu0 %v149
  %223 = vmatpush.msra.mxu0 %v148
  %224 = vmatmul.f32.gmra.mxu0 %v206
  %v225 = vpop.f32.mrf.mxu0
  %v226 = vadd.f32 0.0, %v225
  %227 = vdwg.mxu0
  %v228 = vadd.f32 %v92, %v226
  %v229 = vxor.u32 %v228, 2147483648
  %v230 = vmul.f32 %v229, 1.442695
  %v231 = vpow.pop %v230
  %v232 = vadd.f32 %v231, 1.0
  %v233 = vrcp.pop %v232
  %v234 = vmul.f32 %v232, %v233
  %v235 = vsub.f32 1.0, %v234
  %v236 = vmul.f32 %v233, %v235
  %v237 = vadd.f32 %v233, %v236
  %vm238 = vweird.f32 %v232
  %vm239 = vweird.f32 %v233
  %vm240 = vmor %vm238, %vm239
  %v241 = vsel %vm240, %v233, %v237
  %v242 = vand.u32 2147483647, %v232
  %vm243 = vcmp.eq.f32.partialorder %v242, 8.507059e+37
  %v244 = vand.u32 %v232, 2147483648
  %v245 = vor.u32 1.1754944e-38, %v244
  %v246 = vsel %vm243, %v245, %v241
  %v247 = vmul.f32 1.0, %v246
  %v248 = vmul.f32 %v247, 2.0
  %v249 = vsub.f32 %v248, 1.0
  %v250 = vmul.f32 %v247, %v195
  %252 = vrot.lane.b32.xlu0 %v249, 64
  %v253 = vpop.permute.xlu0 %252
  %v255 = vmul.f32 %v247, %v253
  %257 = vrot.lane.b32.xlu0 %v255, 32
  %v258 = vpop.permute.xlu0 %257
  %v260 = vadd.f32 %v250, %v258
  %v261 = vtanh.pop %v260
  %263 = vrot.lane.b32.xlu0 %v261, 64
  %v264 = vpop.permute.xlu0 %263
  %v266 = vmul.f32 %v247, %v264
  %v268 = vsel %vm205, %v204, 0.0
  %vm269 = vcmask 523264
  %v271 = vsel %vm269, %v268, 0
  %273 = vmatpush.msra.mxu0 0.0
  %274 = vmatpush.msra.mxu0 0.0
  %275 = vmatpush.msra.mxu0 0.0
  %276 = vmatpush.msra.mxu0 0.0
  %277 = vmatpush.msra.mxu0 0.0
  %278 = vmatpush.msra.mxu0 0.0
  %279 = vmatpush.msra.mxu0 0.0
  %280 = vmatpush.msra.mxu0 0.0
  %281 = vmatpush.msra.mxu0 %v159
  %282 = vmatpush.msra.mxu0 %v158
  %283 = vmatpush.msra.mxu0 %v157
  %284 = vmatpush.msra.mxu0 %v156
  %285 = vmatpush.msra.mxu0 %v155
  %286 = vmatpush.msra.mxu0 %v154
  %287 = vmatpush.msra.mxu0 %v153
  %288 = vmatpush.msra.mxu0 %v152
  %289 = vmatmul.f32.gmra.mxu0 %v271
  %v290 = vpop.f32.mrf.mxu0
  %v291 = vadd.f32 %v162, %v290
  %292 = vdwg.mxu0
  %v293 = vxor.u32 %v291, 2147483648
  %v294 = vmul.f32 %v293, 1.442695
  %v295 = vpow.pop %v294
  %v296 = vadd.f32 %v295, 1.0
  %v297 = vrcp.pop %v296
  %v298 = vmul.f32 %v296, %v297
  %v299 = vsub.f32 1.0, %v298
  %v300 = vmul.f32 %v297, %v299
  %v301 = vadd.f32 %v297, %v300
  %vm302 = vweird.f32 %v296
  %vm303 = vweird.f32 %v297
  %vm304 = vmor %vm302, %vm303
  %v305 = vsel %vm304, %v297, %v301
  %v306 = vand.u32 2147483647, %v296
  %vm307 = vcmp.eq.f32.partialorder %v306, 8.507059e+37
  %v308 = vand.u32 %v296, 2147483648
  %v309 = vor.u32 1.1754944e-38, %v308
  %v310 = vsel %vm307, %v309, %v305
  %v311 = vmul.f32 1.0, %v310
  %v312 = vmul.f32 %v311, 2.0
  %v313 = vsub.f32 %v312, 1.0
  %v314 = vmul.f32 %v311, 0.0
  %316 = vrot.lane.b32.xlu0 %v313, 64
  %v317 = vpop.permute.xlu0 %316
  %v319 = vmul.f32 %v311, %v317
  %321 = vrot.lane.b32.xlu0 %v319, 32
  %v322 = vpop.permute.xlu0 %321
  %v324 = vadd.f32 %v314, %v322
  %v325 = vtanh.pop %v324
  %327 = vrot.lane.b32.xlu0 %v325, 64
  %v328 = vpop.permute.xlu0 %327
  %v330 = vmul.f32 %v311, %v328
  %332 = vrot.lane.b32.xlu0 %v330, 32
  %v333 = vpop.permute.xlu0 %332
  %v334 = vsel %vm205, %v333, 0
  %336 = vmatpush.msra.mxu0 0.0
  %337 = vmatpush.msra.mxu0 0.0
  %338 = vmatpush.msra.mxu0 0.0
  %339 = vmatpush.msra.mxu0 0.0
  %340 = vmatpush.msra.mxu0 0.0
  %341 = vmatpush.msra.mxu0 0.0
  %342 = vmatpush.msra.mxu0 0.0
  %343 = vmatpush.msra.mxu0 0.0
  %344 = vmatpush.msra.mxu0 0.0
  %345 = vmatpush.msra.mxu0 0.0
  %346 = vmatpush.msra.mxu0 0.0
  %347 = vmatpush.msra.mxu0 0.0
  %348 = vmatpush.msra.mxu0 %v115
  %349 = vmatpush.msra.mxu0 %v114
  %350 = vmatpush.msra.mxu0 %v113
  %351 = vmatpush.msra.mxu0 %v112
  %352 = vmatmul.f32.gmra.mxu0 %v334
  %v353 = vpop.f32.mrf.mxu0
  %v354 = vadd.f32 0.0, %v353
  %355 = vdwg.mxu0
  %v356 = vadd.f32 %v146, %v354
  %358 = vrot.lane.b32.xlu0 %v266, 32
  %v359 = vpop.permute.xlu0 %358
  %v360 = vsel %vm205, %v359, 0
  %362 = vmatpush.msra.mxu0 0.0
  %363 = vmatpush.msra.mxu0 0.0
  %364 = vmatpush.msra.mxu0 0.0
  %365 = vmatpush.msra.mxu0 0.0
  %366 = vmatpush.msra.mxu0 0.0
  %367 = vmatpush.msra.mxu0 0.0
  %368 = vmatpush.msra.mxu0 0.0
  %369 = vmatpush.msra.mxu0 0.0
  %370 = vmatpush.msra.mxu0 0.0
  %371 = vmatpush.msra.mxu0 0.0
  %372 = vmatpush.msra.mxu0 0.0
  %373 = vmatpush.msra.mxu0 0.0
  %374 = vmatpush.msra.mxu0 %v151
  %375 = vmatpush.msra.mxu0 %v150
  %376 = vmatpush.msra.mxu0 %v149
  %377 = vmatpush.msra.mxu0 %v148
  %378 = vmatmul.f32.gmra.mxu0 %v360
  %v379 = vpop.f32.mrf.mxu0
  %v380 = vadd.f32 0.0, %v379
  %381 = vdwg.mxu0
  %v382 = vadd.f32 %v95, %v380
  %v383 = vxor.u32 %v382, 2147483648
  %v384 = vmul.f32 %v383, 1.442695
  %v385 = vpow.pop %v384
  %v386 = vadd.f32 %v385, 1.0
  %v387 = vrcp.pop %v386
  %v388 = vmul.f32 %v386, %v387
  %v389 = vsub.f32 1.0, %v388
  %v390 = vmul.f32 %v387, %v389
  %v391 = vadd.f32 %v387, %v390
  %vm392 = vweird.f32 %v386
  %vm393 = vweird.f32 %v387
  %vm394 = vmor %vm392, %vm393
  %v395 = vsel %vm394, %v387, %v391
  %v396 = vand.u32 2147483647, %v386
  %vm397 = vcmp.eq.f32.partialorder %v396, 8.507059e+37
  %v398 = vand.u32 %v386, 2147483648
  %v399 = vor.u32 1.1754944e-38, %v398
  %v400 = vsel %vm397, %v399, %v395
  %v401 = vmul.f32 1.0, %v400
  %v402 = vmul.f32 %v401, 2.0
  %v403 = vsub.f32 %v402, 1.0
  %v404 = vmul.f32 %v401, %v260
  %406 = vrot.lane.b32.xlu0 %v403, 64
  %v407 = vpop.permute.xlu0 %406
  %v409 = vmul.f32 %v401, %v407
  %411 = vrot.lane.b32.xlu0 %v409, 32
  %v412 = vpop.permute.xlu0 %411
  %v414 = vadd.f32 %v404, %v412
  %v415 = vtanh.pop %v414
  %417 = vrot.lane.b32.xlu0 %v415, 64
  %v418 = vpop.permute.xlu0 %417
  %v420 = vmul.f32 %v401, %v418
  %422 = vrot.lane.b32.xlu0 %v330, 64
  %v423 = vpop.permute.xlu0 %422
  %v425 = vsel %vm205, %v359, %v423
  %v427 = vsel %vm269, %v425, 0
  %429 = vmatpush.msra.mxu0 0.0
  %430 = vmatpush.msra.mxu0 0.0
  %431 = vmatpush.msra.mxu0 0.0
  %432 = vmatpush.msra.mxu0 0.0
  %433 = vmatpush.msra.mxu0 0.0
  %434 = vmatpush.msra.mxu0 0.0
  %435 = vmatpush.msra.mxu0 0.0
  %436 = vmatpush.msra.mxu0 0.0
  %437 = vmatpush.msra.mxu0 %v159
  %438 = vmatpush.msra.mxu0 %v158
  %439 = vmatpush.msra.mxu0 %v157
  %440 = vmatpush.msra.mxu0 %v156
  %441 = vmatpush.msra.mxu0 %v155
  %442 = vmatpush.msra.mxu0 %v154
  %443 = vmatpush.msra.mxu0 %v153
  %444 = vmatpush.msra.mxu0 %v152
  %445 = vmatmul.f32.gmra.mxu0 %v427
  %v446 = vpop.f32.mrf.mxu0
  %v447 = vadd.f32 %v162, %v446
  %448 = vdwg.mxu0
  %v449 = vxor.u32 %v447, 2147483648
  %v450 = vmul.f32 %v449, 1.442695
  %v451 = vpow.pop %v450
  %v452 = vadd.f32 %v451, 1.0
  %v453 = vrcp.pop %v452
  %v454 = vmul.f32 %v452, %v453
  %v455 = vsub.f32 1.0, %v454
  %v456 = vmul.f32 %v453, %v455
  %v457 = vadd.f32 %v453, %v456
  %vm458 = vweird.f32 %v452
  %vm459 = vweird.f32 %v453
  %vm460 = vmor %vm458, %vm459
  %v461 = vsel %vm460, %v453, %v457
  %v462 = vand.u32 2147483647, %v452
  %vm463 = vcmp.eq.f32.partialorder %v462, 8.507059e+37
  %v464 = vand.u32 %v452, 2147483648
  %v465 = vor.u32 1.1754944e-38, %v464
  %v466 = vsel %vm463, %v465, %v461
  %v467 = vmul.f32 1.0, %v466
  %v468 = vmul.f32 %v467, 2.0
  %v469 = vsub.f32 %v468, 1.0
  %v470 = vmul.f32 %v467, %v324
  %472 = vrot.lane.b32.xlu0 %v469, 64
  %v473 = vpop.permute.xlu0 %472
  %v475 = vmul.f32 %v467, %v473
  %477 = vrot.lane.b32.xlu0 %v475, 32
  %v478 = vpop.permute.xlu0 %477
  %v480 = vadd.f32 %v470, %v478
  %v481 = vtanh.pop %v480
  %483 = vrot.lane.b32.xlu0 %v481, 64
  %v484 = vpop.permute.xlu0 %483
  %v486 = vmul.f32 %v467, %v484
  %488 = vrot.lane.b32.xlu0 %v486, 32
  %v489 = vpop.permute.xlu0 %488
  %v490 = vsel %vm205, %v489, 0
  %492 = vmatpush.msra.mxu0 0.0
  %493 = vmatpush.msra.mxu0 0.0
  %494 = vmatpush.msra.mxu0 0.0
  %495 = vmatpush.msra.mxu0 0.0
  %496 = vmatpush.msra.mxu0 0.0
  %497 = vmatpush.msra.mxu0 0.0
  %498 = vmatpush.msra.mxu0 0.0
  %499 = vmatpush.msra.mxu0 0.0
  %500 = vmatpush.msra.mxu0 0.0
  %501 = vmatpush.msra.mxu0 0.0
  %502 = vmatpush.msra.mxu0 0.0
  %503 = vmatpush.msra.mxu0 0.0
  %504 = vmatpush.msra.mxu0 %v119
  %505 = vmatpush.msra.mxu0 %v118
  %506 = vmatpush.msra.mxu0 %v117
  %507 = vmatpush.msra.mxu0 %v116
  %508 = vmatmul.f32.gmra.mxu0 %v490
  %v509 = vpop.f32.mrf.mxu0
  %v510 = vadd.f32 0.0, %v509
  %511 = vdwg.mxu0
  %v512 = vadd.f32 %v356, %v510
  %514 = vrot.lane.b32.xlu0 %v420, 32
  %v515 = vpop.permute.xlu0 %514
  %v516 = vsel %vm205, %v515, 0
  %518 = vmatpush.msra.mxu0 0.0
  %519 = vmatpush.msra.mxu0 0.0
  %520 = vmatpush.msra.mxu0 0.0
  %521 = vmatpush.msra.mxu0 0.0
  %522 = vmatpush.msra.mxu0 0.0
  %523 = vmatpush.msra.mxu0 0.0
  %524 = vmatpush.msra.mxu0 0.0
  %525 = vmatpush.msra.mxu0 0.0
  %526 = vmatpush.msra.mxu0 0.0
  %527 = vmatpush.msra.mxu0 0.0
  %528 = vmatpush.msra.mxu0 0.0
  %529 = vmatpush.msra.mxu0 0.0
  %530 = vmatpush.msra.mxu0 %v151
  %531 = vmatpush.msra.mxu0 %v150
  %532 = vmatpush.msra.mxu0 %v149
  %533 = vmatpush.msra.mxu0 %v148
  %534 = vmatmul.f32.gmra.mxu0 %v516
  %v535 = vpop.f32.mrf.mxu0
  %v536 = vadd.f32 0.0, %v535
  %537 = vdwg.mxu0
  %v538 = vadd.f32 %v98, %v536
  %v539 = vxor.u32 %v538, 2147483648
  %v540 = vmul.f32 %v539, 1.442695
  %v541 = vpow.pop %v540
  %v542 = vadd.f32 %v541, 1.0
  %v543 = vrcp.pop %v542
  %v544 = vmul.f32 %v542, %v543
  %v545 = vsub.f32 1.0, %v544
  %v546 = vmul.f32 %v543, %v545
  %v547 = vadd.f32 %v543, %v546
  %vm548 = vweird.f32 %v542
  %vm549 = vweird.f32 %v543
  %vm550 = vmor %vm548, %vm549
  %v551 = vsel %vm550, %v543, %v547
  %v552 = vand.u32 2147483647, %v542
  %vm553 = vcmp.eq.f32.partialorder %v552, 8.507059e+37
  %v554 = vand.u32 %v542, 2147483648
  %v555 = vor.u32 1.1754944e-38, %v554
  %v556 = vsel %vm553, %v555, %v551
  %v557 = vmul.f32 1.0, %v556
  %v558 = vmul.f32 %v557, 2.0
  %v559 = vsub.f32 %v558, 1.0
  %v560 = vmul.f32 %v557, %v414
  %562 = vrot.lane.b32.xlu0 %v559, 64
  %v563 = vpop.permute.xlu0 %562
  %v565 = vmul.f32 %v557, %v563
  %567 = vrot.lane.b32.xlu0 %v565, 32
  %v568 = vpop.permute.xlu0 %567
  %v570 = vadd.f32 %v560, %v568
  %v571 = vtanh.pop %v570
  %573 = vrot.lane.b32.xlu0 %v571, 64
  %v574 = vpop.permute.xlu0 %573
  %v576 = vmul.f32 %v557, %v574
  %578 = vrot.lane.b32.xlu0 %v486, 64
  %v579 = vpop.permute.xlu0 %578
  %v581 = vsel %vm205, %v515, %v579
  %v583 = vsel %vm269, %v581, 0
  %585 = vmatpush.msra.mxu0 0.0
  %586 = vmatpush.msra.mxu0 0.0
  %587 = vmatpush.msra.mxu0 0.0
  %588 = vmatpush.msra.mxu0 0.0
  %589 = vmatpush.msra.mxu0 0.0
  %590 = vmatpush.msra.mxu0 0.0
  %591 = vmatpush.msra.mxu0 0.0
  %592 = vmatpush.msra.mxu0 0.0
  %593 = vmatpush.msra.mxu0 %v159
  %594 = vmatpush.msra.mxu0 %v158
  %595 = vmatpush.msra.mxu0 %v157
  %596 = vmatpush.msra.mxu0 %v156
  %597 = vmatpush.msra.mxu0 %v155
  %598 = vmatpush.msra.mxu0 %v154
  %599 = vmatpush.msra.mxu0 %v153
  %600 = vmatpush.msra.mxu0 %v152
  %601 = vmatmul.f32.gmra.mxu0 %v583
  %v602 = vpop.f32.mrf.mxu0
  %v603 = vadd.f32 %v162, %v602
  %604 = vdwg.mxu0
  %v605 = vxor.u32 %v603, 2147483648
  %v606 = vmul.f32 %v605, 1.442695
  %v607 = vpow.pop %v606
  %v608 = vadd.f32 %v607, 1.0
  %v609 = vrcp.pop %v608
  %v610 = vmul.f32 %v608, %v609
  %v611 = vsub.f32 1.0, %v610
  %v612 = vmul.f32 %v609, %v611
  %v613 = vadd.f32 %v609, %v612
  %vm614 = vweird.f32 %v608
  %vm615 = vweird.f32 %v609
  %vm616 = vmor %vm614, %vm615
  %v617 = vsel %vm616, %v609, %v613
  %v618 = vand.u32 2147483647, %v608
  %vm619 = vcmp.eq.f32.partialorder %v618, 8.507059e+37
  %v620 = vand.u32 %v608, 2147483648
  %v621 = vor.u32 1.1754944e-38, %v620
  %v622 = vsel %vm619, %v621, %v617
  %v623 = vmul.f32 1.0, %v622
  %v624 = vmul.f32 %v623, 2.0
  %v625 = vsub.f32 %v624, 1.0
  %v626 = vmul.f32 %v623, %v480
  %628 = vrot.lane.b32.xlu0 %v625, 64
  %v629 = vpop.permute.xlu0 %628
  %v631 = vmul.f32 %v623, %v629
  %633 = vrot.lane.b32.xlu0 %v631, 32
  %v634 = vpop.permute.xlu0 %633
  %v636 = vadd.f32 %v626, %v634
  %v637 = vtanh.pop %v636
  %639 = vrot.lane.b32.xlu0 %v637, 64
  %v640 = vpop.permute.xlu0 %639
  %v642 = vmul.f32 %v623, %v640
  %644 = vrot.lane.b32.xlu0 %v642, 32
  %v645 = vpop.permute.xlu0 %644
  %v646 = vsel %vm205, %v645, 0
  %648 = vmatpush.msra.mxu0 0.0
  %649 = vmatpush.msra.mxu0 0.0
  %650 = vmatpush.msra.mxu0 0.0
  %651 = vmatpush.msra.mxu0 0.0
  %652 = vmatpush.msra.mxu0 0.0
  %653 = vmatpush.msra.mxu0 0.0
  %654 = vmatpush.msra.mxu0 0.0
  %655 = vmatpush.msra.mxu0 0.0
  %656 = vmatpush.msra.mxu0 0.0
  %657 = vmatpush.msra.mxu0 0.0
  %658 = vmatpush.msra.mxu0 0.0
  %659 = vmatpush.msra.mxu0 0.0
  %660 = vmatpush.msra.mxu0 %v123
  %661 = vmatpush.msra.mxu0 %v122
  %662 = vmatpush.msra.mxu0 %v121
  %663 = vmatpush.msra.mxu0 %v120
  %664 = vmatmul.f32.gmra.mxu0 %v646
  %v665 = vpop.f32.mrf.mxu0
  %v666 = vadd.f32 0.0, %v665
  %667 = vdwg.mxu0
  %v668 = vadd.f32 %v512, %v666
  %670 = vrot.lane.b32.xlu0 %v576, 32
  %v671 = vpop.permute.xlu0 %670
  %v672 = vsel %vm205, %v671, 0
  %674 = vmatpush.msra.mxu0 0.0
  %675 = vmatpush.msra.mxu0 0.0
  %676 = vmatpush.msra.mxu0 0.0
  %677 = vmatpush.msra.mxu0 0.0
  %678 = vmatpush.msra.mxu0 0.0
  %679 = vmatpush.msra.mxu0 0.0
  %680 = vmatpush.msra.mxu0 0.0
  %681 = vmatpush.msra.mxu0 0.0
  %682 = vmatpush.msra.mxu0 0.0
  %683 = vmatpush.msra.mxu0 0.0
  %684 = vmatpush.msra.mxu0 0.0
  %685 = vmatpush.msra.mxu0 0.0
  %686 = vmatpush.msra.mxu0 %v151
  %687 = vmatpush.msra.mxu0 %v150
  %688 = vmatpush.msra.mxu0 %v149
  %689 = vmatpush.msra.mxu0 %v148
  %690 = vmatmul.f32.gmra.mxu0 %v672
  %v691 = vpop.f32.mrf.mxu0
  %v692 = vadd.f32 0.0, %v691
  %693 = vdwg.mxu0
  %v694 = vadd.f32 %v101, %v692
  %v695 = vxor.u32 %v694, 2147483648
  %v696 = vmul.f32 %v695, 1.442695
  %v697 = vpow.pop %v696
  %v698 = vadd.f32 %v697, 1.0
  %v699 = vrcp.pop %v698
  %v700 = vmul.f32 %v698, %v699
  %v701 = vsub.f32 1.0, %v700
  %v702 = vmul.f32 %v699, %v701
  %v703 = vadd.f32 %v699, %v702
  %vm704 = vweird.f32 %v698
  %vm705 = vweird.f32 %v699
  %vm706 = vmor %vm704, %vm705
  %v707 = vsel %vm706, %v699, %v703
  %v708 = vand.u32 2147483647, %v698
  %vm709 = vcmp.eq.f32.partialorder %v708, 8.507059e+37
  %v710 = vand.u32 %v698, 2147483648
  %v711 = vor.u32 1.1754944e-38, %v710
  %v712 = vsel %vm709, %v711, %v707
  %v713 = vmul.f32 1.0, %v712
  %v714 = vmul.f32 %v713, 2.0
  %v715 = vsub.f32 %v714, 1.0
  %v716 = vmul.f32 %v713, %v570
  %718 = vrot.lane.b32.xlu0 %v715, 64
  %v719 = vpop.permute.xlu0 %718
  %v721 = vmul.f32 %v713, %v719
  %723 = vrot.lane.b32.xlu0 %v721, 32
  %v724 = vpop.permute.xlu0 %723
  %v726 = vadd.f32 %v716, %v724
  %v727 = vtanh.pop %v726
  %729 = vrot.lane.b32.xlu0 %v727, 64
  %v730 = vpop.permute.xlu0 %729
  %v732 = vmul.f32 %v713, %v730
  %734 = vrot.lane.b32.xlu0 %v642, 64
  %v735 = vpop.permute.xlu0 %734
  %v737 = vsel %vm205, %v671, %v735
  %v739 = vsel %vm269, %v737, 0
  %741 = vmatpush.msra.mxu0 0.0
  %742 = vmatpush.msra.mxu0 0.0
  %743 = vmatpush.msra.mxu0 0.0
  %744 = vmatpush.msra.mxu0 0.0
  %745 = vmatpush.msra.mxu0 0.0
  %746 = vmatpush.msra.mxu0 0.0
  %747 = vmatpush.msra.mxu0 0.0
  %748 = vmatpush.msra.mxu0 0.0
  %749 = vmatpush.msra.mxu0 %v159
  %750 = vmatpush.msra.mxu0 %v158
  %751 = vmatpush.msra.mxu0 %v157
  %752 = vmatpush.msra.mxu0 %v156
  %753 = vmatpush.msra.mxu0 %v155
  %754 = vmatpush.msra.mxu0 %v154
  %755 = vmatpush.msra.mxu0 %v153
  %756 = vmatpush.msra.mxu0 %v152
  %757 = vmatmul.f32.gmra.mxu0 %v739
  %v758 = vpop.f32.mrf.mxu0
  %v759 = vadd.f32 %v162, %v758
  %760 = vdwg.mxu0
  %v761 = vxor.u32 %v759, 2147483648
  %v762 = vmul.f32 %v761, 1.442695
  %v763 = vpow.pop %v762
  %v764 = vadd.f32 %v763, 1.0
  %v765 = vrcp.pop %v764
  %v766 = vmul.f32 %v764, %v765
  %v767 = vsub.f32 1.0, %v766
  %v768 = vmul.f32 %v765, %v767
  %v769 = vadd.f32 %v765, %v768
  %vm770 = vweird.f32 %v764
  %vm771 = vweird.f32 %v765
  %vm772 = vmor %vm770, %vm771
  %v773 = vsel %vm772, %v765, %v769
  %v774 = vand.u32 2147483647, %v764
  %vm775 = vcmp.eq.f32.partialorder %v774, 8.507059e+37
  %v776 = vand.u32 %v764, 2147483648
  %v777 = vor.u32 1.1754944e-38, %v776
  %v778 = vsel %vm775, %v777, %v773
  %v779 = vmul.f32 1.0, %v778
  %v780 = vmul.f32 %v779, 2.0
  %v781 = vsub.f32 %v780, 1.0
  %v782 = vmul.f32 %v779, %v636
  %784 = vrot.lane.b32.xlu0 %v781, 64
  %v785 = vpop.permute.xlu0 %784
  %v787 = vmul.f32 %v779, %v785
  %789 = vrot.lane.b32.xlu0 %v787, 32
  %v790 = vpop.permute.xlu0 %789
  %v792 = vadd.f32 %v782, %v790
  %v793 = vtanh.pop %v792
  %795 = vrot.lane.b32.xlu0 %v793, 64
  %v796 = vpop.permute.xlu0 %795
  %v798 = vmul.f32 %v779, %v796
  %800 = vrot.lane.b32.xlu0 %v798, 32
  %v801 = vpop.permute.xlu0 %800
  %v802 = vsel %vm205, %v801, 0
  %804 = vmatpush.msra.mxu0 0.0
  %805 = vmatpush.msra.mxu0 0.0
  %806 = vmatpush.msra.mxu0 0.0
  %807 = vmatpush.msra.mxu0 0.0
  %808 = vmatpush.msra.mxu0 0.0
  %809 = vmatpush.msra.mxu0 0.0
  %810 = vmatpush.msra.mxu0 0.0
  %811 = vmatpush.msra.mxu0 0.0
  %812 = vmatpush.msra.mxu0 0.0
  %813 = vmatpush.msra.mxu0 0.0
  %814 = vmatpush.msra.mxu0 0.0
  %815 = vmatpush.msra.mxu0 0.0
  %816 = vmatpush.msra.mxu0 %v127
  %817 = vmatpush.msra.mxu0 %v126
  %818 = vmatpush.msra.mxu0 %v125
  %819 = vmatpush.msra.mxu0 %v124
  %820 = vmatmul.f32.gmra.mxu0 %v802
  %v821 = vpop.f32.mrf.mxu0
  %v822 = vadd.f32 0.0, %v821
  %823 = vdwg.mxu0
  %v824 = vadd.f32 %v668, %v822
  %826 = vrot.lane.b32.xlu0 %v732, 32
  %v827 = vpop.permute.xlu0 %826
  %v828 = vsel %vm205, %v827, 0
  %830 = vmatpush.msra.mxu0 0.0
  %831 = vmatpush.msra.mxu0 0.0
  %832 = vmatpush.msra.mxu0 0.0
  %833 = vmatpush.msra.mxu0 0.0
  %834 = vmatpush.msra.mxu0 0.0
  %835 = vmatpush.msra.mxu0 0.0
  %836 = vmatpush.msra.mxu0 0.0
  %837 = vmatpush.msra.mxu0 0.0
  %838 = vmatpush.msra.mxu0 0.0
  %839 = vmatpush.msra.mxu0 0.0
  %840 = vmatpush.msra.mxu0 0.0
  %841 = vmatpush.msra.mxu0 0.0
  %842 = vmatpush.msra.mxu0 %v151
  %843 = vmatpush.msra.mxu0 %v150
  %844 = vmatpush.msra.mxu0 %v149
  %845 = vmatpush.msra.mxu0 %v148
  %846 = vmatmul.f32.gmra.mxu0 %v828
  %v847 = vpop.f32.mrf.mxu0
  %v848 = vadd.f32 0.0, %v847
  %849 = vdwg.mxu0
  %v850 = vadd.f32 %v104, %v848
  %v851 = vxor.u32 %v850, 2147483648
  %v852 = vmul.f32 %v851, 1.442695
  %v853 = vpow.pop %v852
  %v854 = vadd.f32 %v853, 1.0
  %v855 = vrcp.pop %v854
  %v856 = vmul.f32 %v854, %v855
  %v857 = vsub.f32 1.0, %v856
  %v858 = vmul.f32 %v855, %v857
  %v859 = vadd.f32 %v855, %v858
  %vm860 = vweird.f32 %v854
  %vm861 = vweird.f32 %v855
  %vm862 = vmor %vm860, %vm861
  %v863 = vsel %vm862, %v855, %v859
  %v864 = vand.u32 2147483647, %v854
  %vm865 = vcmp.eq.f32.partialorder %v864, 8.507059e+37
  %v866 = vand.u32 %v854, 2147483648
  %v867 = vor.u32 1.1754944e-38, %v866
  %v868 = vsel %vm865, %v867, %v863
  %v869 = vmul.f32 1.0, %v868
  %v870 = vmul.f32 %v869, 2.0
  %v871 = vsub.f32 %v870, 1.0
  %v872 = vmul.f32 %v869, %v726
  %874 = vrot.lane.b32.xlu0 %v871, 64
  %v875 = vpop.permute.xlu0 %874
  %v877 = vmul.f32 %v869, %v875
  %879 = vrot.lane.b32.xlu0 %v877, 32
  %v880 = vpop.permute.xlu0 %879
  %v882 = vadd.f32 %v872, %v880
  %v883 = vtanh.pop %v882
  %885 = vrot.lane.b32.xlu0 %v883, 64
  %v886 = vpop.permute.xlu0 %885
  %v888 = vmul.f32 %v869, %v886
  %890 = vrot.lane.b32.xlu0 %v798, 64
  %v891 = vpop.permute.xlu0 %890
  %v893 = vsel %vm205, %v827, %v891
  %v895 = vsel %vm269, %v893, 0
  %897 = vmatpush.msra.mxu0 0.0
  %898 = vmatpush.msra.mxu0 0.0
  %899 = vmatpush.msra.mxu0 0.0
  %900 = vmatpush.msra.mxu0 0.0
  %901 = vmatpush.msra.mxu0 0.0
  %902 = vmatpush.msra.mxu0 0.0
  %903 = vmatpush.msra.mxu0 0.0
  %904 = vmatpush.msra.mxu0 0.0
  %905 = vmatpush.msra.mxu0 %v159
  %906 = vmatpush.msra.mxu0 %v158
  %907 = vmatpush.msra.mxu0 %v157
  %908 = vmatpush.msra.mxu0 %v156
  %909 = vmatpush.msra.mxu0 %v155
  %910 = vmatpush.msra.mxu0 %v154
  %911 = vmatpush.msra.mxu0 %v153
  %912 = vmatpush.msra.mxu0 %v152
  %913 = vmatmul.f32.gmra.mxu0 %v895
  %v914 = vpop.f32.mrf.mxu0
  %v915 = vadd.f32 %v162, %v914
  %916 = vdwg.mxu0
  %v917 = vxor.u32 %v915, 2147483648
  %v918 = vmul.f32 %v917, 1.442695
  %v919 = vpow.pop %v918
  %v920 = vadd.f32 %v919, 1.0
  %v921 = vrcp.pop %v920
  %v922 = vmul.f32 %v920, %v921
  %v923 = vsub.f32 1.0, %v922
  %v924 = vmul.f32 %v921, %v923
  %v925 = vadd.f32 %v921, %v924
  %vm926 = vweird.f32 %v920
  %vm927 = vweird.f32 %v921
  %vm928 = vmor %vm926, %vm927
  %v929 = vsel %vm928, %v921, %v925
  %v930 = vand.u32 2147483647, %v920
  %vm931 = vcmp.eq.f32.partialorder %v930, 8.507059e+37
  %v932 = vand.u32 %v920, 2147483648
  %v933 = vor.u32 1.1754944e-38, %v932
  %v934 = vsel %vm931, %v933, %v929
  %v935 = vmul.f32 1.0, %v934
  %v936 = vmul.f32 %v935, 2.0
  %v937 = vsub.f32 %v936, 1.0
  %v938 = vmul.f32 %v935, %v792
  %940 = vrot.lane.b32.xlu0 %v937, 64
  %v941 = vpop.permute.xlu0 %940
  %v943 = vmul.f32 %v935, %v941
  %945 = vrot.lane.b32.xlu0 %v943, 32
  %v946 = vpop.permute.xlu0 %945
  %v948 = vadd.f32 %v938, %v946
  %v949 = vtanh.pop %v948
  %951 = vrot.lane.b32.xlu0 %v949, 64
  %v952 = vpop.permute.xlu0 %951
  %v954 = vmul.f32 %v935, %v952
  %956 = vrot.lane.b32.xlu0 %v954, 32
  %v957 = vpop.permute.xlu0 %956
  %v958 = vsel %vm205, %v957, 0
  %960 = vmatpush.msra.mxu0 0.0
  %961 = vmatpush.msra.mxu0 0.0
  %962 = vmatpush.msra.mxu0 0.0
  %963 = vmatpush.msra.mxu0 0.0
  %964 = vmatpush.msra.mxu0 0.0
  %965 = vmatpush.msra.mxu0 0.0
  %966 = vmatpush.msra.mxu0 0.0
  %967 = vmatpush.msra.mxu0 0.0
  %968 = vmatpush.msra.mxu0 0.0
  %969 = vmatpush.msra.mxu0 0.0
  %970 = vmatpush.msra.mxu0 0.0
  %971 = vmatpush.msra.mxu0 0.0
  %972 = vmatpush.msra.mxu0 %v131
  %973 = vmatpush.msra.mxu0 %v130
  %974 = vmatpush.msra.mxu0 %v129
  %975 = vmatpush.msra.mxu0 %v128
  %976 = vmatmul.f32.gmra.mxu0 %v958
  %v977 = vpop.f32.mrf.mxu0
  %v978 = vadd.f32 0.0, %v977
  %979 = vdwg.mxu0
  %v980 = vadd.f32 %v824, %v978
  %982 = vrot.lane.b32.xlu0 %v888, 32
  %v983 = vpop.permute.xlu0 %982
  %v984 = vsel %vm205, %v983, 0
  %986 = vmatpush.msra.mxu0 0.0
  %987 = vmatpush.msra.mxu0 0.0
  %988 = vmatpush.msra.mxu0 0.0
  %989 = vmatpush.msra.mxu0 0.0
  %990 = vmatpush.msra.mxu0 0.0
  %991 = vmatpush.msra.mxu0 0.0
  %992 = vmatpush.msra.mxu0 0.0
  %993 = vmatpush.msra.mxu0 0.0
  %994 = vmatpush.msra.mxu0 0.0
  %995 = vmatpush.msra.mxu0 0.0
  %996 = vmatpush.msra.mxu0 0.0
  %997 = vmatpush.msra.mxu0 0.0
  %998 = vmatpush.msra.mxu0 %v151
  %999 = vmatpush.msra.mxu0 %v150
  %1000 = vmatpush.msra.mxu0 %v149
  %1001 = vmatpush.msra.mxu0 %v148
  %1002 = vmatmul.f32.gmra.mxu0 %v984
  %v1003 = vpop.f32.mrf.mxu0
  %v1004 = vadd.f32 0.0, %v1003
  %1005 = vdwg.mxu0
  %v1006 = vadd.f32 %v107, %v1004
  %v1007 = vxor.u32 %v1006, 2147483648
  %v1008 = vmul.f32 %v1007, 1.442695
  %v1009 = vpow.pop %v1008
  %v1010 = vadd.f32 %v1009, 1.0
  %v1011 = vrcp.pop %v1010
  %v1012 = vmul.f32 %v1010, %v1011
  %v1013 = vsub.f32 1.0, %v1012
  %v1014 = vmul.f32 %v1011, %v1013
  %v1015 = vadd.f32 %v1011, %v1014
  %vm1016 = vweird.f32 %v1010
  %vm1017 = vweird.f32 %v1011
  %vm1018 = vmor %vm1016, %vm1017
  %v1019 = vsel %vm1018, %v1011, %v1015
  %v1020 = vand.u32 2147483647, %v1010
  %vm1021 = vcmp.eq.f32.partialorder %v1020, 8.507059e+37
  %v1022 = vand.u32 %v1010, 2147483648
  %v1023 = vor.u32 1.1754944e-38, %v1022
  %v1024 = vsel %vm1021, %v1023, %v1019
  %v1025 = vmul.f32 1.0, %v1024
  %v1026 = vmul.f32 %v1025, 2.0
  %v1027 = vsub.f32 %v1026, 1.0
  %v1028 = vmul.f32 %v1025, %v882
  %1030 = vrot.lane.b32.xlu0 %v1027, 64
  %v1031 = vpop.permute.xlu0 %1030
  %v1033 = vmul.f32 %v1025, %v1031
  %1035 = vrot.lane.b32.xlu0 %v1033, 32
  %v1036 = vpop.permute.xlu0 %1035
  %v1038 = vadd.f32 %v1028, %v1036
  %v1039 = vtanh.pop %v1038
  %1041 = vrot.lane.b32.xlu0 %v1039, 64
  %v1042 = vpop.permute.xlu0 %1041
  %v1044 = vmul.f32 %v1025, %v1042
  %1046 = vrot.lane.b32.xlu0 %v954, 64
  %v1047 = vpop.permute.xlu0 %1046
  %v1049 = vsel %vm205, %v983, %v1047
  %v1051 = vsel %vm269, %v1049, 0
  %1053 = vmatpush.msra.mxu0 0.0
  %1054 = vmatpush.msra.mxu0 0.0
  %1055 = vmatpush.msra.mxu0 0.0
  %1056 = vmatpush.msra.mxu0 0.0
  %1057 = vmatpush.msra.mxu0 0.0
  %1058 = vmatpush.msra.mxu0 0.0
  %1059 = vmatpush.msra.mxu0 0.0
  %1060 = vmatpush.msra.mxu0 0.0
  %1061 = vmatpush.msra.mxu0 %v159
  %1062 = vmatpush.msra.mxu0 %v158
  %1063 = vmatpush.msra.mxu0 %v157
  %1064 = vmatpush.msra.mxu0 %v156
  %1065 = vmatpush.msra.mxu0 %v155
  %1066 = vmatpush.msra.mxu0 %v154
  %1067 = vmatpush.msra.mxu0 %v153
  %1068 = vmatpush.msra.mxu0 %v152
  %1069 = vmatmul.f32.gmra.mxu0 %v1051
  %v1070 = vpop.f32.mrf.mxu0
  %v1071 = vadd.f32 %v162, %v1070
  %1072 = vdwg.mxu0
  %v1073 = vxor.u32 %v1071, 2147483648
  %v1074 = vmul.f32 %v1073, 1.442695
  %v1075 = vpow.pop %v1074
  %v1076 = vadd.f32 %v1075, 1.0
  %v1077 = vrcp.pop %v1076
  %v1078 = vmul.f32 %v1076, %v1077
  %v1079 = vsub.f32 1.0, %v1078
  %v1080 = vmul.f32 %v1077, %v1079
  %v1081 = vadd.f32 %v1077, %v1080
  %vm1082 = vweird.f32 %v1076
  %vm1083 = vweird.f32 %v1077
  %vm1084 = vmor %vm1082, %vm1083
  %v1085 = vsel %vm1084, %v1077, %v1081
  %v1086 = vand.u32 2147483647, %v1076
  %vm1087 = vcmp.eq.f32.partialorder %v1086, 8.507059e+37
  %v1088 = vand.u32 %v1076, 2147483648
  %v1089 = vor.u32 1.1754944e-38, %v1088
  %v1090 = vsel %vm1087, %v1089, %v1085
  %v1091 = vmul.f32 1.0, %v1090
  %v1092 = vmul.f32 %v1091, 2.0
  %v1093 = vsub.f32 %v1092, 1.0
  %v1094 = vmul.f32 %v1091, %v948
  %1096 = vrot.lane.b32.xlu0 %v1093, 64
  %v1097 = vpop.permute.xlu0 %1096
  %v1099 = vmul.f32 %v1091, %v1097
  %1101 = vrot.lane.b32.xlu0 %v1099, 32
  %v1102 = vpop.permute.xlu0 %1101
  %v1104 = vadd.f32 %v1094, %v1102
  %v1105 = vtanh.pop %v1104
  %1107 = vrot.lane.b32.xlu0 %v1105, 64
  %v1108 = vpop.permute.xlu0 %1107
  %v1110 = vmul.f32 %v1091, %v1108
  %1112 = vrot.lane.b32.xlu0 %v1110, 32
  %v1113 = vpop.permute.xlu0 %1112
  %v1114 = vsel %vm205, %v1113, 0
  %1116 = vmatpush.msra.mxu0 0.0
  %1117 = vmatpush.msra.mxu0 0.0
  %1118 = vmatpush.msra.mxu0 0.0
  %1119 = vmatpush.msra.mxu0 0.0
  %1120 = vmatpush.msra.mxu0 0.0
  %1121 = vmatpush.msra.mxu0 0.0
  %1122 = vmatpush.msra.mxu0 0.0
  %1123 = vmatpush.msra.mxu0 0.0
  %1124 = vmatpush.msra.mxu0 0.0
  %1125 = vmatpush.msra.mxu0 0.0
  %1126 = vmatpush.msra.mxu0 0.0
  %1127 = vmatpush.msra.mxu0 0.0
  %1128 = vmatpush.msra.mxu0 %v135
  %1129 = vmatpush.msra.mxu0 %v134
  %1130 = vmatpush.msra.mxu0 %v133
  %1131 = vmatpush.msra.mxu0 %v132
  %1132 = vmatmul.f32.gmra.mxu0 %v1114
  %v1133 = vpop.f32.mrf.mxu0
  %v1134 = vadd.f32 0.0, %v1133
  %1135 = vdwg.mxu0
  %v1136 = vadd.f32 %v980, %v1134
  %1138 = vrot.lane.b32.xlu0 %v1044, 32
  %v1139 = vpop.permute.xlu0 %1138
  %v1140 = vsel %vm205, %v1139, 0
  %1142 = vmatpush.msra.mxu0 0.0
  %1143 = vmatpush.msra.mxu0 0.0
  %1144 = vmatpush.msra.mxu0 0.0
  %1145 = vmatpush.msra.mxu0 0.0
  %1146 = vmatpush.msra.mxu0 0.0
  %1147 = vmatpush.msra.mxu0 0.0
  %1148 = vmatpush.msra.mxu0 0.0
  %1149 = vmatpush.msra.mxu0 0.0
  %1150 = vmatpush.msra.mxu0 0.0
  %1151 = vmatpush.msra.mxu0 0.0
  %1152 = vmatpush.msra.mxu0 0.0
  %1153 = vmatpush.msra.mxu0 0.0
  %1154 = vmatpush.msra.mxu0 %v151
  %1155 = vmatpush.msra.mxu0 %v150
  %1156 = vmatpush.msra.mxu0 %v149
  %1157 = vmatpush.msra.mxu0 %v148
  %1158 = vmatmul.f32.gmra.mxu0 %v1140
  %v1159 = vpop.f32.mrf.mxu0
  %v1160 = vadd.f32 0.0, %v1159
  %1161 = vdwg.mxu0
  %v1162 = vadd.f32 %v110, %v1160
  %v1163 = vxor.u32 %v1162, 2147483648
  %v1164 = vmul.f32 %v1163, 1.442695
  %v1165 = vpow.pop %v1164
  %v1166 = vadd.f32 %v1165, 1.0
  %v1167 = vrcp.pop %v1166
  %v1168 = vmul.f32 %v1166, %v1167
  %v1169 = vsub.f32 1.0, %v1168
  %v1170 = vmul.f32 %v1167, %v1169
  %v1171 = vadd.f32 %v1167, %v1170
  %vm1172 = vweird.f32 %v1166
  %vm1173 = vweird.f32 %v1167
  %vm1174 = vmor %vm1172, %vm1173
  %v1175 = vsel %vm1174, %v1167, %v1171
  %v1176 = vand.u32 2147483647, %v1166
  %vm1177 = vcmp.eq.f32.partialorder %v1176, 8.507059e+37
  %v1178 = vand.u32 %v1166, 2147483648
  %v1179 = vor.u32 1.1754944e-38, %v1178
  %v1180 = vsel %vm1177, %v1179, %v1175
  %v1181 = vmul.f32 1.0, %v1180
  %v1182 = vmul.f32 %v1181, 2.0
  %v1183 = vsub.f32 %v1182, 1.0
  %v1184 = vmul.f32 %v1181, %v1038
  %1186 = vrot.lane.b32.xlu0 %v1183, 64
  %v1187 = vpop.permute.xlu0 %1186
  %v1189 = vmul.f32 %v1181, %v1187
  %1191 = vrot.lane.b32.xlu0 %v1189, 32
  %v1192 = vpop.permute.xlu0 %1191
  %v1194 = vadd.f32 %v1184, %v1192
  %v1195 = vtanh.pop %v1194
  %1197 = vrot.lane.b32.xlu0 %v1195, 64
  %v1198 = vpop.permute.xlu0 %1197
  %v1200 = vmul.f32 %v1181, %v1198
  %1202 = vrot.lane.b32.xlu0 %v1110, 64
  %v1203 = vpop.permute.xlu0 %1202
  %v1205 = vsel %vm205, %v1139, %v1203
  %v1207 = vsel %vm269, %v1205, 0
  %1209 = vmatpush.msra.mxu0 0.0
  %1210 = vmatpush.msra.mxu0 0.0
  %1211 = vmatpush.msra.mxu0 0.0
  %1212 = vmatpush.msra.mxu0 0.0
  %1213 = vmatpush.msra.mxu0 0.0
  %1214 = vmatpush.msra.mxu0 0.0
  %1215 = vmatpush.msra.mxu0 0.0
  %1216 = vmatpush.msra.mxu0 0.0
  %1217 = vmatpush.msra.mxu0 %v159
  %1218 = vmatpush.msra.mxu0 %v158
  %1219 = vmatpush.msra.mxu0 %v157
  %1220 = vmatpush.msra.mxu0 %v156
  %1221 = vmatpush.msra.mxu0 %v155
  %1222 = vmatpush.msra.mxu0 %v154
  %1223 = vmatpush.msra.mxu0 %v153
  %1224 = vmatpush.msra.mxu0 %v152
  %1225 = vmatmul.f32.gmra.mxu0 %v1207
  %v1226 = vpop.f32.mrf.mxu0
  %v1227 = vadd.f32 %v162, %v1226
  %1228 = vdwg.mxu0
  %v1229 = vxor.u32 %v1227, 2147483648
  %v1230 = vmul.f32 %v1229, 1.442695
  %v1231 = vpow.pop %v1230
  %v1232 = vadd.f32 %v1231, 1.0
  %v1233 = vrcp.pop %v1232
  %v1234 = vmul.f32 %v1232, %v1233
  %v1235 = vsub.f32 1.0, %v1234
  %v1236 = vmul.f32 %v1233, %v1235
  %v1237 = vadd.f32 %v1233, %v1236
  %vm1238 = vweird.f32 %v1232
  %vm1239 = vweird.f32 %v1233
  %vm1240 = vmor %vm1238, %vm1239
  %v1241 = vsel %vm1240, %v1233, %v1237
  %v1242 = vand.u32 2147483647, %v1232
  %vm1243 = vcmp.eq.f32.partialorder %v1242, 8.507059e+37
  %v1244 = vand.u32 %v1232, 2147483648
  %v1245 = vor.u32 1.1754944e-38, %v1244
  %v1246 = vsel %vm1243, %v1245, %v1241
  %v1247 = vmul.f32 1.0, %v1246
  %v1248 = vmul.f32 %v1247, 2.0
  %v1249 = vsub.f32 %v1248, 1.0
  %v1250 = vmul.f32 %v1247, %v1104
  %1252 = vrot.lane.b32.xlu0 %v1249, 64
  %v1253 = vpop.permute.xlu0 %1252
  %v1255 = vmul.f32 %v1247, %v1253
  %1257 = vrot.lane.b32.xlu0 %v1255, 32
  %v1258 = vpop.permute.xlu0 %1257
  %v1260 = vadd.f32 %v1250, %v1258
  %v1261 = vtanh.pop %v1260
  %1263 = vrot.lane.b32.xlu0 %v1261, 64
  %v1264 = vpop.permute.xlu0 %1263
  %v1266 = vmul.f32 %v1247, %v1264
  %1268 = vrot.lane.b32.xlu0 %v1266, 32
  %v1269 = vpop.permute.xlu0 %1268
  %v1270 = vsel %vm205, %v1269, 0
  %1272 = vmatpush.msra.mxu0 0.0
  %1273 = vmatpush.msra.mxu0 0.0
  %1274 = vmatpush.msra.mxu0 0.0
  %1275 = vmatpush.msra.mxu0 0.0
  %1276 = vmatpush.msra.mxu0 0.0
  %1277 = vmatpush.msra.mxu0 0.0
  %1278 = vmatpush.msra.mxu0 0.0
  %1279 = vmatpush.msra.mxu0 0.0
  %1280 = vmatpush.msra.mxu0 0.0
  %1281 = vmatpush.msra.mxu0 0.0
  %1282 = vmatpush.msra.mxu0 0.0
  %1283 = vmatpush.msra.mxu0 0.0
  %1284 = vmatpush.msra.mxu0 %v139
  %1285 = vmatpush.msra.mxu0 %v138
  %1286 = vmatpush.msra.mxu0 %v137
  %1287 = vmatpush.msra.mxu0 %v136
  %1288 = vmatmul.f32.gmra.mxu0 %v1270
  %v1289 = vpop.f32.mrf.mxu0
  %v1290 = vadd.f32 0.0, %v1289
  %1291 = vdwg.mxu0
  %v1292 = vadd.f32 %v1136, %v1290
  %1294 = vrot.lane.b32.xlu0 %v1200, 32
  %v1295 = vpop.permute.xlu0 %1294
  %1297 = vrot.lane.b32.xlu0 %v1266, 64
  %v1298 = vpop.permute.xlu0 %1297
  %v1300 = vsel %vm205, %v1295, %v1298
  %v1302 = vsel %vm269, %v1300, 0
  %1304 = vmatpush.msra.mxu0 0.0
  %1305 = vmatpush.msra.mxu0 0.0
  %1306 = vmatpush.msra.mxu0 0.0
  %1307 = vmatpush.msra.mxu0 0.0
  %1308 = vmatpush.msra.mxu0 0.0
  %1309 = vmatpush.msra.mxu0 0.0
  %1310 = vmatpush.msra.mxu0 0.0
  %1311 = vmatpush.msra.mxu0 0.0
  %1312 = vmatpush.msra.mxu0 %v159
  %1313 = vmatpush.msra.mxu0 %v158
  %1314 = vmatpush.msra.mxu0 %v157
  %1315 = vmatpush.msra.mxu0 %v156
  %1316 = vmatpush.msra.mxu0 %v155
  %1317 = vmatpush.msra.mxu0 %v154
  %1318 = vmatpush.msra.mxu0 %v153
  %1319 = vmatpush.msra.mxu0 %v152
  %1320 = vmatmul.f32.gmra.mxu0 %v1302
  %v1321 = vpop.f32.mrf.mxu0
  %v1322 = vadd.f32 %v162, %v1321
  %1323 = vdwg.mxu0
  %v1324 = vxor.u32 %v1322, 2147483648
  %v1325 = vmul.f32 %v1324, 1.442695
  %v1326 = vpow.pop %v1325
  %v1327 = vadd.f32 %v1326, 1.0
  %v1328 = vrcp.pop %v1327
  %v1329 = vmul.f32 %v1327, %v1328
  %v1330 = vsub.f32 1.0, %v1329
  %v1331 = vmul.f32 %v1328, %v1330
  %v1332 = vadd.f32 %v1328, %v1331
  %vm1333 = vweird.f32 %v1327
  %vm1334 = vweird.f32 %v1328
  %vm1335 = vmor %vm1333, %vm1334
  %v1336 = vsel %vm1335, %v1328, %v1332
  %v1337 = vand.u32 2147483647, %v1327
  %vm1338 = vcmp.eq.f32.partialorder %v1337, 8.507059e+37
  %v1339 = vand.u32 %v1327, 2147483648
  %v1340 = vor.u32 1.1754944e-38, %v1339
  %v1341 = vsel %vm1338, %v1340, %v1336
  %v1342 = vmul.f32 1.0, %v1341
  %v1343 = vmul.f32 %v1342, 2.0
  %v1344 = vsub.f32 %v1343, 1.0
  %v1345 = vmul.f32 %v1342, %v1260
  %1347 = vrot.lane.b32.xlu0 %v1344, 64
  %v1348 = vpop.permute.xlu0 %1347
  %v1350 = vmul.f32 %v1342, %v1348
  %1352 = vrot.lane.b32.xlu0 %v1350, 32
  %v1353 = vpop.permute.xlu0 %1352
  %v1355 = vadd.f32 %v1345, %v1353
  %v1356 = vtanh.pop %v1355
  %1358 = vrot.lane.b32.xlu0 %v1356, 64
  %v1359 = vpop.permute.xlu0 %1358
  %v1361 = vmul.f32 %v1342, %v1359
  %1363 = vrot.lane.b32.xlu0 %v1361, 32
  %v1364 = vpop.permute.xlu0 %1363
  %v1365 = vsel %vm205, %v1364, 0
  %1367 = vmatpush.msra.mxu0 0.0
  %1368 = vmatpush.msra.mxu0 0.0
  %1369 = vmatpush.msra.mxu0 0.0
  %1370 = vmatpush.msra.mxu0 0.0
  %1371 = vmatpush.msra.mxu0 0.0
  %1372 = vmatpush.msra.mxu0 0.0
  %1373 = vmatpush.msra.mxu0 0.0
  %1374 = vmatpush.msra.mxu0 0.0
  %1375 = vmatpush.msra.mxu0 0.0
  %1376 = vmatpush.msra.mxu0 0.0
  %1377 = vmatpush.msra.mxu0 0.0
  %1378 = vmatpush.msra.mxu0 0.0
  %1379 = vmatpush.msra.mxu0 %v143
  %1380 = vmatpush.msra.mxu0 %v142
  %1381 = vmatpush.msra.mxu0 %v141
  %1382 = vmatpush.msra.mxu0 %v140
  %1383 = vmatmul.f32.gmra.mxu0 %v1365
  %v1384 = vpop.f32.mrf.mxu0
  %v1385 = vadd.f32 0.0, %v1384
  %1386 = vdwg.mxu0
  %v1387 = vadd.f32 %v1292, %v1385
  %1388 = vst.msk [vmem:[%s8] sm:$0xff] %vm42, %v1387
  // Predicated region
  $region34: #{fire_predictor_forward.1} parent=0 // pred_check
    _
  $region35: #{fire_predictor_forward.1} parent=0 // pred_check_branch
    %1390 = sbr.rel (0) target = $region37
  $region36: #{fire_predictor_forward.1} parent=0 // pred_region
    _
  $region37: #{fire_predictor_forward.1} parent=0 // pred_fallthru
    _
  // Predicated region
  $region38: #{fire_predictor_forward.1} parent=0 // pred_check
    _
  $region39: #{fire_predictor_forward.1} parent=0 // pred_check_branch
    %1392 = sbr.rel (0) target = $region41
  $region40: #{fire_predictor_forward.1} parent=0 // pred_region
    _
  $region41: #{fire_predictor_forward.1} parent=0 // pred_fallthru
    _

</llo_original>
